<compile_context>
chip_gen: v6e
topology: v6e:2x2x1
jax: 0.10.0
libtpu: 0.0.40
codegen_flags: <defaults>
</compile_context>

<pallas_src>
import functools

import jax
import jax.numpy as jnp
from jax import lax
from jax.experimental import pallas as pl
from jax.experimental.pallas import tpu as pltpu


# ------------------------------ fused Pallas kernel ------------------------------

def _bottleneck_kernel(x_ref, w1_ref, b1_ref, w2_ref, b2_ref, w3_ref, b3_ref,
                       o_ref, slab_ref, *, B, H, matmul_dtype):
    """One grid step = B images; all three convs + BN + ReLU + residual fused.

    Shapes (L* = W * channels, i.e. one image row packed into lanes):
      x_ref    (B, H, Lin)    row-packed input, f32
      w1_ref   (Lin, Lw)      conv1 (1x1) as block-diag kron(I_W, w1 * bn1_scale)
      w2_ref   (3, Lw, Lw)    conv2 (3x3): one block-tridiagonal matrix per row tap dy
      w3_ref   (Lw, Lout)     conv3 (1x1) as block-diag kron(I_W, w3 * bn3_scale)
      b*_ref   (1, L*)        folded BN biases, tiled per pixel
      o_ref    (B, H, Lout)   row-packed output (lane-dense: Lout = W * Cout)
      slab_ref (B, H+2, Lw)   VMEM scratch: h1 with a 1-row zero halo above / below
    """
    Lin = x_ref.shape[-1]
    Lw = w1_ref.shape[-1]
    Lout = o_ref.shape[-1]
    BH = B * H

    # ---- stage 1: conv1 (1x1, block-diag) + folded BN1 + ReLU --------------------
    xm = x_ref[...].reshape(BH, Lin).astype(matmul_dtype)
    h1 = jnp.dot(xm, w1_ref[...], preferred_element_type=jnp.float32)
    h1 = jnp.maximum(h1 + b1_ref[...], 0.0)

    # h1 -> padded slab (one zero halo row above / below each image).  The halo rows
    # are rewritten every step instead of being gated on program_id == 0: with a
    # "parallel" grid axis each TensorCore owns a private scratch, so only one core
    # would ever see step 0.  Cost: 2*B single-row, 128-lane stores — noise.
    zero_row = jnp.zeros((B, 1, Lw), matmul_dtype)
    slab_ref[:, 0:1, :] = zero_row
    slab_ref[:, H + 1:H + 2, :] = zero_row
    slab_ref[:, 1:H + 1, :] = h1.astype(matmul_dtype).reshape(B, H, Lw)

    # ---- stage 2: conv2 (3x3, pad=1) as 3 banded matmuls + folded BN2 + ReLU -----
    # Column taps (dx = -1/0/+1) are folded into the block-tridiagonal w2_ref[t]
    # (edge columns handled by the band structure -> no masks at all); row taps (dy)
    # read the slab at row offset t = dy + 1 (zero halo rows = the zero padding).
    acc = jnp.zeros((BH, Lw), jnp.float32)
    for t in range(3):  # static unroll; the offset-1/2 loads are tiny (2 vregs each)
        v = slab_ref[:, t:t + H, :].reshape(BH, Lw)
        acc = acc + jnp.dot(v, w2_ref[t], preferred_element_type=jnp.float32)
    h2 = jnp.maximum(acc + b2_ref[...], 0.0)

    # ---- stage 3: conv3 (1x1, block-diag) + folded BN3 + residual + ReLU ---------
    y = jnp.dot(h2.astype(matmul_dtype), w3_ref[...],
                preferred_element_type=jnp.float32)
    x_res = x_ref[...].reshape(BH, Lin).astype(jnp.float32)  # reload: short live range
    y = y + b3_ref[...] + x_res
    o_ref[...] = jnp.maximum(y, 0.0).reshape(B, H, Lout).astype(o_ref.dtype)


# --------------------------------- wrapper ---------------------------------------

def _pick_images_per_step(n_images, cap=8):
    """Largest divisor of N that still leaves >= 2 grid steps (v7x has 2 TensorCores)."""
    best = 1
    for b in range(1, min(n_images, cap) + 1):
        if n_images % b == 0 and n_images // b >= 2:
            best = b
    return best


def bottleneck_forward(x, p, *, stride=1, matmul_dtype=jnp.bfloat16,
                       images_per_step=None):
    """Fused Bottleneck forward.  x is NHWC float32; returns NHWC float32.

    matmul_dtype=bfloat16 keeps the MXU single-pass on v5e/v6e/v7x; accumulation and
    the bias / residual / ReLU epilogue are always float32.
    """
    assert stride == 1, "TODO(synk): stride>1 / downsample path not modeled"
    N, H, W, Cin = x.shape
    width = p["w1"].shape[1]
    Cout = p["w3"].shape[1]
    assert Cin == Cout, "identity shortcut requires inplanes == planes * expansion"

    B = images_per_step if images_per_step is not None else _pick_images_per_step(N)
    assert N % B == 0

    Lin, Lw, Lout = W * Cin, W * width, W * Cout

    # Fold eval-mode BN scales into the conv weights and pack them for the row-dense
    # layout: 1x1 convs -> block-diagonal, 3x3 conv -> block-tridiagonal (per row tap).
    eye = jnp.eye(W, dtype=jnp.float32)
    sup = jnp.eye(W, k=1, dtype=jnp.float32)    # pairs with dx = -1 taps (kw = 0)
    sub = jnp.eye(W, k=-1, dtype=jnp.float32)   # pairs with dx = +1 taps (kw = 2)
    w1bd = jnp.kron(eye, p["w1"] * p["s1"]).astype(matmul_dtype)             # (Lin, Lw)
    w2f = p["w2_hwio"] * p["s2"][0]                                          # (3,3,wi,wo)
    w2band = jnp.stack([
        jnp.kron(sup, w2f[kh, 0]) + jnp.kron(eye, w2f[kh, 1]) + jnp.kron(sub, w2f[kh, 2])
        for kh in range(3)
    ]).astype(matmul_dtype)                                                  # (3, Lw, Lw)
    w3bd = jnp.kron(eye, p["w3"] * p["s3"]).astype(matmul_dtype)             # (Lw, Lout)
    b1r = jnp.tile(p["b1"], (1, W))                                          # (1, Lw)
    b2r = jnp.tile(p["b2"], (1, W))                                          # (1, Lw)
    b3r = jnp.tile(p["b3"], (1, W))                                          # (1, Lout)

    x_rows = x.reshape(N, H, Lin)               # free view: NHWC -> (N, H, W*Cin)

    # VMEM budget (v7x has only 64 MiB physical / 32 MiB default scoped limit):
    # double-buffered x/out blocks + (once-fetched) weights + the h1 slab scratch.
    isz = jnp.dtype(matmul_dtype).itemsize
    blk = B * H * (Lin + Lout) * x.dtype.itemsize
    wts = (Lin * Lw + 3 * Lw * Lw + Lw * Lout) * isz + (2 * Lw + Lout) * 4
    slab = B * (H + 2) * Lw * isz
    approx_vmem = 2 * blk + 2 * wts + slab
    vmem_limit = int(min(48 << 20, max(32 << 20, 2 * approx_vmem)))

    kernel = functools.partial(_bottleneck_kernel, B=B, H=H, matmul_dtype=matmul_dtype)
    out = pl.pallas_call(
        kernel,
        out_shape=jax.ShapeDtypeStruct((N, H, Lout), x.dtype),
        grid_spec=pltpu.PrefetchScalarGridSpec(
            num_scalar_prefetch=0,
            grid=(N // B,),                               # B images per (parallel) step
            in_specs=[
                pl.BlockSpec((B, H, Lin), lambda n: (n, 0, 0)),        # x (row-packed)
                pl.BlockSpec((Lin, Lw), lambda n: (0, 0)),             # conv1 block-diag
                pl.BlockSpec((1, Lw), lambda n: (0, 0)),               # b1
                pl.BlockSpec((3, Lw, Lw), lambda n: (0, 0, 0)),        # conv2 bands
                pl.BlockSpec((1, Lw), lambda n: (0, 0)),               # b2
                pl.BlockSpec((Lw, Lout), lambda n: (0, 0)),            # conv3 block-diag
                pl.BlockSpec((1, Lout), lambda n: (0, 0)),             # b3
            ],
            out_specs=pl.BlockSpec((B, H, Lout), lambda n: (n, 0, 0)), # lane-dense out
            scratch_shapes=[pltpu.VMEM((B, H + 2, Lw), matmul_dtype)],
        ),
        compiler_params=pltpu.CompilerParams(
            dimension_semantics=("parallel",),
            vmem_limit_bytes=vmem_limit),
    )(x_rows, w1bd, b1r, w2band, b2r, w3bd, b3r)
    return out.reshape(N, H, W, Cout)           # free view back to NHWC


# --------------------------- params (deterministic) -------------------------------

def _fold_bn(gamma, beta, mean, var, eps=1e-5):
    scale = gamma / jnp.sqrt(var + eps)
    bias = beta - mean * scale
    return scale[None, :], bias[None, :]


def init_params(key, inplanes, planes, base_width=64):
    width = int(planes * (base_width / 64.0))
    outp = planes * 4  # expansion = 4
    ks = jax.random.split(key, 15)

    def bn(k0, k1, k2, k3, c):
        gamma = jax.random.uniform(k0, (c,), jnp.float32, 0.5, 1.5)
        beta = jax.random.normal(k1, (c,), jnp.float32) * 0.1
        mean = jax.random.normal(k2, (c,), jnp.float32) * 0.1
        var = jax.random.uniform(k3, (c,), jnp.float32, 0.5, 1.5)
        return _fold_bn(gamma, beta, mean, var)

    w1 = jax.random.normal(ks[0], (inplanes, width), jnp.float32) * 0.1
    w2_hwio = jax.random.normal(ks[1], (3, 3, width, width), jnp.float32) * 0.1
    w3 = jax.random.normal(ks[2], (width, outp), jnp.float32) * 0.1
    s1, b1 = bn(ks[3], ks[4], ks[5], ks[6], width)
    s2, b2 = bn(ks[7], ks[8], ks[9], ks[10], width)
    s3, b3 = bn(ks[11], ks[12], ks[13], ks[14], outp)
    return dict(w1=w1, w2_hwio=w2_hwio, w3=w3,
                s1=s1, b1=b1, s2=s2, b2=b2, s3=s3, b3=b3)


# ----------------------------- plain-JAX reference --------------------------------

def bottleneck_reference(x, p, *, stride=1):
    dn = ("NHWC", "HWIO", "NHWC")
    h = lax.conv_general_dilated(x, p["w1"][None, None], (1, 1), "VALID",
                                 dimension_numbers=dn)
    h = jnp.maximum(h * p["s1"][0] + p["b1"][0], 0.0)
    h = lax.conv_general_dilated(h, p["w2_hwio"], (stride, stride),
                                 [(1, 1), (1, 1)], dimension_numbers=dn)
    h = jnp.maximum(h * p["s2"][0] + p["b2"][0], 0.0)
    h = lax.conv_general_dilated(h, p["w3"][None, None], (1, 1), "VALID",
                                 dimension_numbers=dn)
    h = h * p["s3"][0] + p["b3"][0] + x
    return jnp.maximum(h, 0.0)


# ------------------------------------ main -----------------------------------------

if __name__ == "__main__":
    key = jax.random.PRNGKey(0)
    kx, kp = jax.random.split(key)

    inplanes, planes = 32, 8           # planes * expansion == inplanes -> identity shortcut
    N, H, W = 8, 16, 16
    x = jax.random.normal(kx, (N, H, W, inplanes), jnp.float32)   # NHWC
    params = init_params(kp, inplanes, planes)

    ref = bottleneck_reference(x, params, stride=1)

    # default path: bfloat16 MXU operands, f32 accumulation / epilogue
    fwd_bf16 = jax.jit(lambda xx: bottleneck_forward(xx, params, stride=1))
    out_bf16 = jax.block_until_ready(fwd_bf16(x))
    assert out_bf16.shape == (N, H, W, planes * 4), out_bf16.shape
    err_bf16 = float(jnp.max(jnp.abs(out_bf16 - ref)))
    assert err_bf16 < 1.5e-1, f"bf16 max abs err {err_bf16}"

    # float32 MXU operands: tight check against the XLA reference
    fwd_f32 = jax.jit(lambda xx: bottleneck_forward(xx, params, stride=1,
                                                    matmul_dtype=jnp.float32))
    out_f32 = jax.block_until_ready(fwd_f32(x))
    err_f32 = float(jnp.max(jnp.abs(out_f32 - ref)))
    assert err_f32 < 2e-3, f"f32 max abs err {err_f32}"

    print("KERNEL_OK")
</pallas_src>

<mosaic_0001>
module attributes {stable_mosaic.version = 11 : i64} {
  func.func @_bottleneck_kernel(%arg0: i32, %arg1: memref<4x16x512xf32, #tpu.memory_space<vmem>>, %arg2: memref<512x128xbf16, #tpu.memory_space<vmem>>, %arg3: memref<1x128xf32, #tpu.memory_space<vmem>>, %arg4: memref<3x128x128xbf16, #tpu.memory_space<vmem>>, %arg5: memref<1x128xf32, #tpu.memory_space<vmem>>, %arg6: memref<128x512xbf16, #tpu.memory_space<vmem>>, %arg7: memref<1x512xf32, #tpu.memory_space<vmem>>, %arg8: memref<4x16x512xf32, #tpu.memory_space<vmem>>, %arg9: memref<4x18x128xbf16, #tpu.memory_space<vmem>>) attributes {dimension_semantics = [#tpu.dimension_semantics<parallel>], iteration_bounds = array<i64: 2>, scalar_prefetch = 0 : i64, scratch_operands = 1 : i64, tpu.core_type = #tpu.core_type<tc>, window_params = [{transform_indices = @transform_0, window_bounds = array<i64: 4, 16, 512>}, {pipeline_mode = #tpu.pipeline_mode<synchronous>, transform_indices = @transform_1, window_bounds = array<i64: 512, 128>}, {pipeline_mode = #tpu.pipeline_mode<synchronous>, transform_indices = @transform_2, window_bounds = array<i64: 1, 128>}, {pipeline_mode = #tpu.pipeline_mode<synchronous>, transform_indices = @transform_3, window_bounds = array<i64: 3, 128, 128>}, {pipeline_mode = #tpu.pipeline_mode<synchronous>, transform_indices = @transform_4, window_bounds = array<i64: 1, 128>}, {pipeline_mode = #tpu.pipeline_mode<synchronous>, transform_indices = @transform_5, window_bounds = array<i64: 128, 512>}, {pipeline_mode = #tpu.pipeline_mode<synchronous>, transform_indices = @transform_6, window_bounds = array<i64: 1, 512>}, {transform_indices = @transform_7, window_bounds = array<i64: 4, 16, 512>}]} {
    %c0 = arith.constant 0 : index
    %c0_0 = arith.constant 0 : index
    %c0_1 = arith.constant 0 : index
    %0 = vector.load %arg1[%c0, %c0_0, %c0_1] : memref<4x16x512xf32, #tpu.memory_space<vmem>>, vector<4x16x512xf32>
    %1 = vector.shape_cast %0 : vector<4x16x512xf32> to vector<64x512xf32>
    %2 = arith.truncf %1 : vector<64x512xf32> to vector<64x512xbf16>
    %c0_2 = arith.constant 0 : index
    %c0_3 = arith.constant 0 : index
    %3 = vector.load %arg2[%c0_2, %c0_3] : memref<512x128xbf16, #tpu.memory_space<vmem>>, vector<512x128xbf16>
    %cst = arith.constant dense<0.000000e+00> : vector<64x128xf32>
    %4 = tpu.matmul %2, %3, %cst {dimension_numbers = #tpu.dot_dimension_numbers<[1], [0], [0], [1], [0, 0, 1, 1], [], []>} : vector<64x512xbf16>, vector<512x128xbf16>, vector<64x128xf32> -> vector<64x128xf32>
    %c0_4 = arith.constant 0 : index
    %c0_5 = arith.constant 0 : index
    %5 = vector.load %arg3[%c0_4, %c0_5] : memref<1x128xf32, #tpu.memory_space<vmem>>, vector<1x128xf32>
    %6 = vector.broadcast %5 : vector<1x128xf32> to vector<64x128xf32>
    %7 = arith.addf %4, %6 : vector<64x128xf32>
    %cst_6 = arith.constant 0.000000e+00 : f32
    %8 = vector.broadcast %cst_6 : f32 to vector<64x128xf32>
    %9 = arith.maximumf %7, %8 : vector<64x128xf32>
    %cst_7 = arith.constant 0.000000e+00 : bf16
    %10 = vector.broadcast %cst_7 : bf16 to vector<4x1x128xbf16>
    %c0_8 = arith.constant 0 : index
    %c0_9 = arith.constant 0 : index
    %c0_10 = arith.constant 0 : index
    %11 = vector.load %arg9[%c0_8, %c0_9, %c0_10] : memref<4x18x128xbf16, #tpu.memory_space<vmem>>, vector<4x1x128xbf16>
    tpu.vector_store %arg9[%c0_8, %c0_9, %c0_10], %10 {strides = array<i32>} : memref<4x18x128xbf16, #tpu.memory_space<vmem>>, vector<4x1x128xbf16>,
    %c0_11 = arith.constant 0 : index
    %c17 = arith.constant 17 : index
    %c0_12 = arith.constant 0 : index
    %12 = vector.load %arg9[%c0_11, %c17, %c0_12] : memref<4x18x128xbf16, #tpu.memory_space<vmem>>, vector<4x1x128xbf16>
    tpu.vector_store %arg9[%c0_11, %c17, %c0_12], %10 {strides = array<i32>} : memref<4x18x128xbf16, #tpu.memory_space<vmem>>, vector<4x1x128xbf16>,
    %13 = arith.truncf %9 : vector<64x128xf32> to vector<64x128xbf16>
    %14 = vector.shape_cast %13 : vector<64x128xbf16> to vector<4x16x128xbf16>
    %c0_13 = arith.constant 0 : index
    %c1 = arith.constant 1 : index
    %c0_14 = arith.constant 0 : index
    %15 = vector.load %arg9[%c0_13, %c1, %c0_14] : memref<4x18x128xbf16, #tpu.memory_space<vmem>>, vector<4x16x128xbf16>
    tpu.vector_store %arg9[%c0_13, %c1, %c0_14], %14 {strides = array<i32>} : memref<4x18x128xbf16, #tpu.memory_space<vmem>>, vector<4x16x128xbf16>,
    %cst_15 = arith.constant 0.000000e+00 : f32
    %16 = vector.broadcast %cst_15 : f32 to vector<64x128xf32>
    %c0_16 = arith.constant 0 : index
    %c0_17 = arith.constant 0 : index
    %c0_18 = arith.constant 0 : index
    %17 = vector.load %arg9[%c0_16, %c0_17, %c0_18] : memref<4x18x128xbf16, #tpu.memory_space<vmem>>, vector<4x16x128xbf16>
    %18 = vector.shape_cast %17 : vector<4x16x128xbf16> to vector<64x128xbf16>
    %c0_19 = arith.constant 0 : index
    %c0_20 = arith.constant 0 : index
    %c0_21 = arith.constant 0 : index
    %19 = vector.load %arg4[%c0_19, %c0_20, %c0_21] : memref<3x128x128xbf16, #tpu.memory_space<vmem>>, vector<1x128x128xbf16>
    %20 = vector.shape_cast %19 : vector<1x128x128xbf16> to vector<128x128xbf16>
    %cst_22 = arith.constant dense<0.000000e+00> : vector<64x128xf32>
    %21 = tpu.matmul %18, %20, %cst_22 {dimension_numbers = #tpu.dot_dimension_numbers<[1], [0], [0], [1], [0, 0, 1, 1], [], []>} : vector<64x128xbf16>, vector<128x128xbf16>, vector<64x128xf32> -> vector<64x128xf32>
    %22 = arith.addf %16, %21 : vector<64x128xf32>
    %c0_23 = arith.constant 0 : index
    %c1_24 = arith.constant 1 : index
    %c0_25 = arith.constant 0 : index
    %23 = vector.load %arg9[%c0_23, %c1_24, %c0_25] : memref<4x18x128xbf16, #tpu.memory_space<vmem>>, vector<4x16x128xbf16>
    %24 = vector.shape_cast %23 : vector<4x16x128xbf16> to vector<64x128xbf16>
    %c1_26 = arith.constant 1 : index
    %c0_27 = arith.constant 0 : index
    %c0_28 = arith.constant 0 : index
    %25 = vector.load %arg4[%c1_26, %c0_27, %c0_28] : memref<3x128x128xbf16, #tpu.memory_space<vmem>>, vector<1x128x128xbf16>
    %26 = vector.shape_cast %25 : vector<1x128x128xbf16> to vector<128x128xbf16>
    %cst_29 = arith.constant dense<0.000000e+00> : vector<64x128xf32>
    %27 = tpu.matmul %24, %26, %cst_29 {dimension_numbers = #tpu.dot_dimension_numbers<[1], [0], [0], [1], [0, 0, 1, 1], [], []>} : vector<64x128xbf16>, vector<128x128xbf16>, vector<64x128xf32> -> vector<64x128xf32>
    %28 = arith.addf %22, %27 : vector<64x128xf32>
    %c0_30 = arith.constant 0 : index
    %c2 = arith.constant 2 : index
    %c0_31 = arith.constant 0 : index
    %29 = vector.load %arg9[%c0_30, %c2, %c0_31] : memref<4x18x128xbf16, #tpu.memory_space<vmem>>, vector<4x16x128xbf16>
    %30 = vector.shape_cast %29 : vector<4x16x128xbf16> to vector<64x128xbf16>
    %c2_32 = arith.constant 2 : index
    %c0_33 = arith.constant 0 : index
    %c0_34 = arith.constant 0 : index
    %31 = vector.load %arg4[%c2_32, %c0_33, %c0_34] : memref<3x128x128xbf16, #tpu.memory_space<vmem>>, vector<1x128x128xbf16>
    %32 = vector.shape_cast %31 : vector<1x128x128xbf16> to vector<128x128xbf16>
    %cst_35 = arith.constant dense<0.000000e+00> : vector<64x128xf32>
    %33 = tpu.matmul %30, %32, %cst_35 {dimension_numbers = #tpu.dot_dimension_numbers<[1], [0], [0], [1], [0, 0, 1, 1], [], []>} : vector<64x128xbf16>, vector<128x128xbf16>, vector<64x128xf32> -> vector<64x128xf32>
    %34 = arith.addf %28, %33 : vector<64x128xf32>
    %c0_36 = arith.constant 0 : index
    %c0_37 = arith.constant 0 : index
    %35 = vector.load %arg5[%c0_36, %c0_37] : memref<1x128xf32, #tpu.memory_space<vmem>>, vector<1x128xf32>
    %36 = vector.broadcast %35 : vector<1x128xf32> to vector<64x128xf32>
    %37 = arith.addf %34, %36 : vector<64x128xf32>
    %cst_38 = arith.constant 0.000000e+00 : f32
    %38 = vector.broadcast %cst_38 : f32 to vector<64x128xf32>
    %39 = arith.maximumf %37, %38 : vector<64x128xf32>
    %40 = arith.truncf %39 : vector<64x128xf32> to vector<64x128xbf16>
    %c0_39 = arith.constant 0 : index
    %c0_40 = arith.constant 0 : index
    %41 = vector.load %arg6[%c0_39, %c0_40] : memref<128x512xbf16, #tpu.memory_space<vmem>>, vector<128x512xbf16>
    %cst_41 = arith.constant dense<0.000000e+00> : vector<64x512xf32>
    %42 = tpu.matmul %40, %41, %cst_41 {dimension_numbers = #tpu.dot_dimension_numbers<[1], [0], [0], [1], [0, 0, 1, 1], [], []>} : vector<64x128xbf16>, vector<128x512xbf16>, vector<64x512xf32> -> vector<64x512xf32>
    %c0_42 = arith.constant 0 : index
    %c0_43 = arith.constant 0 : index
    %c0_44 = arith.constant 0 : index
    %43 = vector.load %arg1[%c0_42, %c0_43, %c0_44] : memref<4x16x512xf32, #tpu.memory_space<vmem>>, vector<4x16x512xf32>
    %44 = vector.shape_cast %43 : vector<4x16x512xf32> to vector<64x512xf32>
    %c0_45 = arith.constant 0 : index
    %c0_46 = arith.constant 0 : index
    %45 = vector.load %arg7[%c0_45, %c0_46] : memref<1x512xf32, #tpu.memory_space<vmem>>, vector<1x512xf32>
    %46 = vector.broadcast %45 : vector<1x512xf32> to vector<64x512xf32>
    %47 = arith.addf %42, %46 : vector<64x512xf32>
    %48 = arith.addf %47, %44 : vector<64x512xf32>
    %cst_47 = arith.constant 0.000000e+00 : f32
    %49 = vector.broadcast %cst_47 : f32 to vector<64x512xf32>
    %50 = arith.maximumf %48, %49 : vector<64x512xf32>
    %51 = vector.shape_cast %50 : vector<64x512xf32> to vector<4x16x512xf32>
    %c0_48 = arith.constant 0 : index
    %c0_49 = arith.constant 0 : index
    %c0_50 = arith.constant 0 : index
    %52 = vector.load %arg8[%c0_48, %c0_49, %c0_50] : memref<4x16x512xf32, #tpu.memory_space<vmem>>, vector<4x16x512xf32>
    tpu.vector_store %arg8[%c0_48, %c0_49, %c0_50], %51 {strides = array<i32>} : memref<4x16x512xf32, #tpu.memory_space<vmem>>, vector<4x16x512xf32>,
    return
  }
  func.func @transform_0(%arg0: i32) -> (i32, i32, i32) {
    %c0_i32 = arith.constant 0 : i32
    %c0_i32_0 = arith.constant 0 : i32
    %c0_i32_1 = arith.constant 0 : i32
    return %arg0, %c0_i32, %c0_i32_0 : i32, i32, i32
  }
  func.func @transform_1(%arg0: i32) -> (i32, i32) {
    %c0_i32 = arith.constant 0 : i32
    %c0_i32_0 = arith.constant 0 : i32
    %c0_i32_1 = arith.constant 0 : i32
    return %c0_i32, %c0_i32_0 : i32, i32
  }
  func.func @transform_2(%arg0: i32) -> (i32, i32) {
    %c0_i32 = arith.constant 0 : i32
    %c0_i32_0 = arith.constant 0 : i32
    %c0_i32_1 = arith.constant 0 : i32
    return %c0_i32, %c0_i32_0 : i32, i32
  }
  func.func @transform_3(%arg0: i32) -> (i32, i32, i32) {
    %c0_i32 = arith.constant 0 : i32
    %c0_i32_0 = arith.constant 0 : i32
    %c0_i32_1 = arith.constant 0 : i32
    %c0_i32_2 = arith.constant 0 : i32
    return %c0_i32, %c0_i32_0, %c0_i32_1 : i32, i32, i32
  }
  func.func @transform_4(%arg0: i32) -> (i32, i32) {
    %c0_i32 = arith.constant 0 : i32
    %c0_i32_0 = arith.constant 0 : i32
    %c0_i32_1 = arith.constant 0 : i32
    return %c0_i32, %c0_i32_0 : i32, i32
  }
  func.func @transform_5(%arg0: i32) -> (i32, i32) {
    %c0_i32 = arith.constant 0 : i32
    %c0_i32_0 = arith.constant 0 : i32
    %c0_i32_1 = arith.constant 0 : i32
    return %c0_i32, %c0_i32_0 : i32, i32
  }
  func.func @transform_6(%arg0: i32) -> (i32, i32) {
    %c0_i32 = arith.constant 0 : i32
    %c0_i32_0 = arith.constant 0 : i32
    %c0_i32_1 = arith.constant 0 : i32
    return %c0_i32, %c0_i32_0 : i32, i32
  }
  func.func @transform_7(%arg0: i32) -> (i32, i32, i32) {
    %c0_i32 = arith.constant 0 : i32
    %c0_i32_0 = arith.constant 0 : i32
    %c0_i32_1 = arith.constant 0 : i32
    return %arg0, %c0_i32, %c0_i32_0 : i32, i32, i32
  }
}

</mosaic_0001>

<llo_original>
// kernel: _lambda_.1
$region0: #{_lambda_.1}
  #allocation0 [shape = 'u32[]', space=smem, size = 0x4, offset = 0x4, fixed_abs, tag = 'smem constant byte address 0x4 - core index']
  #allocation1 [shape = 'u32[144,128]{1,0:T(1,128)}', space=vmem, size = 0x12000, scoped, tag = 'internal scratch']
  #allocation2 [shape = 'bf16[4,18,128]{2,1,0:T(8,128)(2,1)}', space=vmem, size = 0x6000, scoped, tag = 'scratch operand']
  %s0 = inlined_call_operand.vmem [shape: f32[8,16,512], index: 0, kind: input, shape index: {}]
  %s1 = inlined_call_operand.vmem [shape: bf16[512,128], index: 1, kind: input, shape index: {}]
  %s2 = inlined_call_operand.vmem [shape: f32[1,128], index: 2, kind: input, shape index: {}]
  %s3 = inlined_call_operand.vmem [shape: bf16[3,128,128], index: 3, kind: input, shape index: {}]
  %s4 = inlined_call_operand.vmem [shape: f32[1,128], index: 4, kind: input, shape index: {}]
  %s5 = inlined_call_operand.vmem [shape: bf16[128,512], index: 5, kind: input, shape index: {}]
  %s6 = inlined_call_operand.vmem [shape: f32[1,512], index: 6, kind: input, shape index: {}]
  %s7 = inlined_call_operand.vmem [shape: f32[8,16,512], index: 7, kind: output, shape index: {}]
  %s8 = sld [smem:[#allocation0]]
  $region61: #{_lambda_.1} parent=0
    _
  %s10 = ssub.s32 1, %s8
  %s11 = scalar_select 0, %s10, %s8
  loop: start=0, step=1, limit=4
  $region2: #{_lambda_.1} parent=0 // loop_pre_header
    _
  $region3: #{_lambda_.1} parent=0 // loop_header
    %s13 = sphi 0, %s17
    %p14 = scmp.ge.s32.totalorder %s13, 4
    %s23 = sphi 0, %s25
    %s26 = sphi 0, %s23
    %s27 = sphi 0, %s26
    %s43 = sphi 0, %s27
    %s47 = sphi 0, %s47
    %s49 = sphi 0, %s47
    %s50 = sphi 0, %s49
    %s64 = sphi 0, %s50
    %s68 = sphi 0, %s68
    %s70 = sphi 0, %s68
    %s71 = sphi 0, %s70
    %s85 = sphi 0, %s71
    %s89 = sphi 0, %s89
    %s91 = sphi 0, %s89
    %s92 = sphi 0, %s91
    %s106 = sphi 0, %s92
    %s110 = sphi 0, %s110
    %s112 = sphi 0, %s110
    %s113 = sphi 0, %s112
    %s127 = sphi 0, %s113
    %s131 = sphi 0, %s131
    %s133 = sphi 0, %s131
    %s134 = sphi 0, %s133
    %s148 = sphi 0, %s134
    %s152 = sphi 0, %s152
    %s154 = sphi 0, %s152
    %s155 = sphi 0, %s154
    %s169 = sphi 0, %s155
    %s175 = sphi 0, %s177
    %s178 = sphi 0, %s175
    %s179 = sphi 0, %s178
    %s195 = sphi 0, %s179
  $region4: #{_lambda_.1} parent=0 // loop_header_branch
    %16 = sbr.rel (%p14) target = $region8
  $region5: #{_lambda_.1} parent=0 // loop_body
    %s18 = ssub.s32 %s13, 1
    %s19 = ssub.s32 %s13, 2
    %s20 = sadd.s32 %s13, 1
    %s21 = ssub.s32 %s13, %s20
    %p22 = scmp.eq.s32.totalorder %s21, 0
    %s24 = sadd.s32 %s23, 1
    %s25 = scalar_select %p22, %s23, %s24
    %p28 = pneg %p22
    %p29 = scmp.eq.s32.totalorder %s13, 1
    %p30 = por %p28, %p29
    %p31 = scmp.ne.s32.totalorder %s23, %s26
    %p32 = scmp.eq.s32.totalorder %s13, 0
    %p33 = por %p31, %p32
    %p34 = scmp.ne.s32.totalorder %s23, %s26
    %p35 = scmp.eq.s32.totalorder %s18, 1
    %p36 = por %p34, %p35
    %p37 = scmp.ne.s32.totalorder %s26, %s27
    %p38 = scmp.eq.s32.totalorder %s18, 0
    %p39 = por %p37, %p38
    %p40 = scmp.ne.s32.totalorder %s26, %s27
    %p41 = scmp.eq.s32.totalorder %s19, 1
    %p42 = por %p40, %p41
    %p44 = scmp.ne.s32.totalorder %s27, %s43
    %p45 = scmp.eq.s32.totalorder %s19, 0
    %p46 = por %p44, %p45
    %s48 = sadd.s32 %s47, 1
    %p51 = scmp.eq.s32.totalorder %s13, 1
    %p52 = scmp.ne.s32.totalorder %s47, %s49
    %p53 = scmp.eq.s32.totalorder %s13, 0
    %p54 = por %p52, %p53
    %p55 = scmp.ne.s32.totalorder %s47, %s49
    %p56 = scmp.eq.s32.totalorder %s18, 1
    %p57 = por %p55, %p56
    %p58 = scmp.ne.s32.totalorder %s49, %s50
    %p59 = scmp.eq.s32.totalorder %s18, 0
    %p60 = por %p58, %p59
    %p61 = scmp.ne.s32.totalorder %s49, %s50
    %p62 = scmp.eq.s32.totalorder %s19, 1
    %p63 = por %p61, %p62
    %p65 = scmp.ne.s32.totalorder %s50, %s64
    %p66 = scmp.eq.s32.totalorder %s19, 0
    %p67 = por %p65, %p66
    %s69 = sadd.s32 %s68, 1
    %p72 = scmp.eq.s32.totalorder %s13, 1
    %p73 = scmp.ne.s32.totalorder %s68, %s70
    %p74 = scmp.eq.s32.totalorder %s13, 0
    %p75 = por %p73, %p74
    %p76 = scmp.ne.s32.totalorder %s68, %s70
    %p77 = scmp.eq.s32.totalorder %s18, 1
    %p78 = por %p76, %p77
    %p79 = scmp.ne.s32.totalorder %s70, %s71
    %p80 = scmp.eq.s32.totalorder %s18, 0
    %p81 = por %p79, %p80
    %p82 = scmp.ne.s32.totalorder %s70, %s71
    %p83 = scmp.eq.s32.totalorder %s19, 1
    %p84 = por %p82, %p83
    %p86 = scmp.ne.s32.totalorder %s71, %s85
    %p87 = scmp.eq.s32.totalorder %s19, 0
    %p88 = por %p86, %p87
    %s90 = sadd.s32 %s89, 1
    %p93 = scmp.eq.s32.totalorder %s13, 1
    %p94 = scmp.ne.s32.totalorder %s89, %s91
    %p95 = scmp.eq.s32.totalorder %s13, 0
    %p96 = por %p94, %p95
    %p97 = scmp.ne.s32.totalorder %s89, %s91
    %p98 = scmp.eq.s32.totalorder %s18, 1
    %p99 = por %p97, %p98
    %p100 = scmp.ne.s32.totalorder %s91, %s92
    %p101 = scmp.eq.s32.totalorder %s18, 0
    %p102 = por %p100, %p101
    %p103 = scmp.ne.s32.totalorder %s91, %s92
    %p104 = scmp.eq.s32.totalorder %s19, 1
    %p105 = por %p103, %p104
    %p107 = scmp.ne.s32.totalorder %s92, %s106
    %p108 = scmp.eq.s32.totalorder %s19, 0
    %p109 = por %p107, %p108
    %s111 = sadd.s32 %s110, 1
    %p114 = scmp.eq.s32.totalorder %s13, 1
    %p115 = scmp.ne.s32.totalorder %s110, %s112
    %p116 = scmp.eq.s32.totalorder %s13, 0
    %p117 = por %p115, %p116
    %p118 = scmp.ne.s32.totalorder %s110, %s112
    %p119 = scmp.eq.s32.totalorder %s18, 1
    %p120 = por %p118, %p119
    %p121 = scmp.ne.s32.totalorder %s112, %s113
    %p122 = scmp.eq.s32.totalorder %s18, 0
    %p123 = por %p121, %p122
    %p124 = scmp.ne.s32.totalorder %s112, %s113
    %p125 = scmp.eq.s32.totalorder %s19, 1
    %p126 = por %p124, %p125
    %p128 = scmp.ne.s32.totalorder %s113, %s127
    %p129 = scmp.eq.s32.totalorder %s19, 0
    %p130 = por %p128, %p129
    %s132 = sadd.s32 %s131, 1
    %p135 = scmp.eq.s32.totalorder %s13, 1
    %p136 = scmp.ne.s32.totalorder %s131, %s133
    %p137 = scmp.eq.s32.totalorder %s13, 0
    %p138 = por %p136, %p137
    %p139 = scmp.ne.s32.totalorder %s131, %s133
    %p140 = scmp.eq.s32.totalorder %s18, 1
    %p141 = por %p139, %p140
    %p142 = scmp.ne.s32.totalorder %s133, %s134
    %p143 = scmp.eq.s32.totalorder %s18, 0
    %p144 = por %p142, %p143
    %p145 = scmp.ne.s32.totalorder %s133, %s134
    %p146 = scmp.eq.s32.totalorder %s19, 1
    %p147 = por %p145, %p146
    %p149 = scmp.ne.s32.totalorder %s134, %s148
    %p150 = scmp.eq.s32.totalorder %s19, 0
    %p151 = por %p149, %p150
    %s153 = sadd.s32 %s152, 1
    %p156 = scmp.eq.s32.totalorder %s13, 1
    %p157 = scmp.ne.s32.totalorder %s152, %s154
    %p158 = scmp.eq.s32.totalorder %s13, 0
    %p159 = por %p157, %p158
    %p160 = scmp.ne.s32.totalorder %s152, %s154
    %p161 = scmp.eq.s32.totalorder %s18, 1
    %p162 = por %p160, %p161
    %p163 = scmp.ne.s32.totalorder %s154, %s155
    %p164 = scmp.eq.s32.totalorder %s18, 0
    %p165 = por %p163, %p164
    %p166 = scmp.ne.s32.totalorder %s154, %s155
    %p167 = scmp.eq.s32.totalorder %s19, 1
    %p168 = por %p166, %p167
    %p170 = scmp.ne.s32.totalorder %s155, %s169
    %p171 = scmp.eq.s32.totalorder %s19, 0
    %p172 = por %p170, %p171
    %s173 = ssub.s32 %s13, %s20
    %p174 = scmp.eq.s32.totalorder %s173, 0
    %s176 = sadd.s32 %s175, 1
    %s177 = scalar_select %p174, %s175, %s176
    %p180 = pneg %p174
    %p181 = scmp.eq.s32.totalorder %s13, 1
    %p182 = por %p180, %p181
    %p183 = scmp.ne.s32.totalorder %s175, %s178
    %p184 = scmp.eq.s32.totalorder %s13, 0
    %p185 = por %p183, %p184
    %p186 = scmp.ne.s32.totalorder %s175, %s178
    %p187 = scmp.eq.s32.totalorder %s18, 1
    %p188 = por %p186, %p187
    %p189 = scmp.ne.s32.totalorder %s178, %s179
    %p190 = scmp.eq.s32.totalorder %s18, 0
    %p191 = por %p189, %p190
    %p192 = scmp.ne.s32.totalorder %s178, %s179
    %p193 = scmp.eq.s32.totalorder %s19, 1
    %p194 = por %p192, %p193
    %p196 = scmp.ne.s32.totalorder %s179, %s195
    %p197 = scmp.eq.s32.totalorder %s19, 0
    %p198 = por %p196, %p197
    %p199 = scmp.le.s32.totalorder 1, %s13
    %p200 = scmp.lt.s32.totalorder %s13, 3
    %p201 = pnand %p199, %p200
    %p202 = pneg %p201
    // Predicated region
    $region9: #{_lambda_.1} parent=5 // pred_check
      _
    $region10: #{_lambda_.1} parent=5 // pred_check_branch
      %204 = sbr.rel (%p201) target = $region12
    $region11: #{_lambda_.1} parent=5 // pred_region
      %s205 = ssub.s32 %s13, 1
      // Predicated region
      $region13: #{_lambda_.1} parent=11 // pred_check
        %p206 = pneg %p60
      $region14: #{_lambda_.1} parent=11 // pred_check_branch
        %208 = sbr.rel (%p206) target = $region16
      $region15: #{_lambda_.1} parent=11 // pred_region
        _
      $region16: #{_lambda_.1} parent=11 // pred_fallthru
        _
      // Predicated region
      $region17: #{_lambda_.1} parent=11 // pred_check
        %p209 = pneg %p81
      $region18: #{_lambda_.1} parent=11 // pred_check_branch
        %211 = sbr.rel (%p209) target = $region20
      $region19: #{_lambda_.1} parent=11 // pred_region
        _
      $region20: #{_lambda_.1} parent=11 // pred_fallthru
        _
      // Predicated region
      $region21: #{_lambda_.1} parent=11 // pred_check
        %p212 = pneg %p102
      $region22: #{_lambda_.1} parent=11 // pred_check_branch
        %214 = sbr.rel (%p212) target = $region24
      $region23: #{_lambda_.1} parent=11 // pred_region
        _
      $region24: #{_lambda_.1} parent=11 // pred_fallthru
        _
      // Predicated region
      $region25: #{_lambda_.1} parent=11 // pred_check
        %p215 = pneg %p123
      $region26: #{_lambda_.1} parent=11 // pred_check_branch
        %217 = sbr.rel (%p215) target = $region28
      $region27: #{_lambda_.1} parent=11 // pred_region
        _
      $region28: #{_lambda_.1} parent=11 // pred_fallthru
        _
      // Predicated region
      $region29: #{_lambda_.1} parent=11 // pred_check
        %p218 = pneg %p144
      $region30: #{_lambda_.1} parent=11 // pred_check_branch
        %220 = sbr.rel (%p218) target = $region32
      $region31: #{_lambda_.1} parent=11 // pred_region
        _
      $region32: #{_lambda_.1} parent=11 // pred_fallthru
        _
      // Predicated region
      $region33: #{_lambda_.1} parent=11 // pred_check
        %p221 = pneg %p165
      $region34: #{_lambda_.1} parent=11 // pred_check_branch
        %223 = sbr.rel (%p221) target = $region36
      $region35: #{_lambda_.1} parent=11 // pred_region
        _
      $region36: #{_lambda_.1} parent=11 // pred_fallthru
        _
    $region12: #{_lambda_.1} parent=5 // pred_fallthru
      _
    %p224 = scmp.lt.s32.totalorder %s13, 2
    // Predicated region
    $region37: #{_lambda_.1} parent=5 // pred_check
      %p225 = pneg %p224
    $region38: #{_lambda_.1} parent=5 // pred_check_branch
      %227 = sbr.rel (%p225) target = $region40
    $region39: #{_lambda_.1} parent=5 // pred_region
      // Predicated region
      $region41: #{_lambda_.1} parent=39 // pred_check
        %p228 = pneg %p33
      $region42: #{_lambda_.1} parent=39 // pred_check_branch
        %230 = sbr.rel (%p228) target = $region44
      $region43: #{_lambda_.1} parent=39 // pred_region
        %s231 = smul.u32 4, %s13
        %p232 = scmp.lt.s32.totalorder %s231, 7
        %s233 = scalar_select %p232, %s231, 7
        %s234 = smul.addr %s233, 8
        %s235 = smul.addr %s234, 8
        %s236 = scalar_lea.vmem %s0, %s235
        %s237 = smul.u32 4, %s13
      $region44: #{_lambda_.1} parent=39 // pred_fallthru
        _
    $region40: #{_lambda_.1} parent=5 // pred_fallthru
      _
    %p238 = scmp.le.s32.totalorder 1, %s13
    %p239 = scmp.lt.s32.totalorder %s13, 3
    %p240 = pnand %p238, %p239
    %p241 = pneg %p240
    // Predicated region
    $region45: #{_lambda_.1} parent=5 // pred_check
      _
    $region46: #{_lambda_.1} parent=5 // pred_check_branch
      %243 = sbr.rel (%p240) target = $region48
    $region47: #{_lambda_.1} parent=5 // pred_region
      %s244 = ssub.s32 %s13, 1
      %s245 = smul.u32 4, %s18
      %p246 = scmp.lt.s32.totalorder %s245, 7
      %s247 = scalar_select %p246, %s245, 7
      %s248 = smul.addr %s247, 8
      %s249 = smul.addr %s248, 8
      %s250 = scalar_lea.vmem %s0, %s249
      %p251 = pneg %p39
      %p252 = pneg %p36
      %p253 = pneg %p60
      %p254 = pneg %p57
      %p255 = pneg %p81
      %p256 = pneg %p78
      %p257 = pneg %p102
      %p258 = pneg %p99
      %p259 = pneg %p123
      %p260 = pneg %p120
      %p261 = pneg %p144
      %p262 = pneg %p141
      %p263 = pneg %p165
      %p264 = pneg %p162
      %p265 = pneg %p191
      %p266 = pneg %p188
      %s267 = smul.u32 4, %s18
      %p268 = scmp.lt.s32.totalorder %s267, 7
      %s269 = scalar_select %p268, %s267, 7
      %s270 = smul.addr %s269, 8
      %s271 = smul.addr %s270, 8
      %s272 = scalar_lea.vmem %s7, %s271
      %s273 = smul.u32 4, %s18
      %p274 = scmp.lt.s32.totalorder %s273, 7
      %s275 = scalar_select %p274, %s273, 7
      %s276 = smul.addr %s275, 8
      %s277 = smul.addr %s276, 8
      %s278 = scalar_lea.vmem %s0, %s277
      %s279 = smul.u32 4, %s18
      %s280 = smul.u32 4, %s18
      %p281 = scmp.lt.s32.totalorder %s280, 7
      %s282 = scalar_select %p281, %s280, 7
      %s283 = smul.addr %s282, 8
      %s284 = smul.addr %s283, 8
      %s285 = scalar_lea.vmem %s7, %s284
      %s286 = smul.u32 4, %s18
      %v288 = vld [vmem:[%s278] sm:$0xff]
      %v289 = vld [vmem:[%s278 + $0x8] sm:$0xff]
      %v290 = vld [vmem:[%s278 + $0x10] sm:$0xff]
      %v291 = vld [vmem:[%s278 + $0x18] sm:$0xff]
      %v292 = vld [vmem:[%s278 + $0x20] sm:$0xff]
      %v293 = vld [vmem:[%s278 + $0x28] sm:$0xff]
      %v294 = vld [vmem:[%s278 + $0x30] sm:$0xff]
      %v295 = vld [vmem:[%s278 + $0x38] sm:$0xff]
      %v296 = vld [vmem:[%s278 + $0x40] sm:$0xff]
      %v297 = vld [vmem:[%s278 + $0x48] sm:$0xff]
      %v298 = vld [vmem:[%s278 + $0x50] sm:$0xff]
      %v299 = vld [vmem:[%s278 + $0x58] sm:$0xff]
      %v300 = vld [vmem:[%s278 + $0x60] sm:$0xff]
      %v301 = vld [vmem:[%s278 + $0x68] sm:$0xff]
      %v302 = vld [vmem:[%s278 + $0x70] sm:$0xff]
      %v303 = vld [vmem:[%s278 + $0x78] sm:$0xff]
      %v304 = vld [vmem:[%s278 + $0x80] sm:$0xff]
      %v305 = vld [vmem:[%s278 + $0x88] sm:$0xff]
      %v306 = vld [vmem:[%s278 + $0x90] sm:$0xff]
      %v307 = vld [vmem:[%s278 + $0x98] sm:$0xff]
      %v308 = vld [vmem:[%s278 + $0xa0] sm:$0xff]
      %v309 = vld [vmem:[%s278 + $0xa8] sm:$0xff]
      %v310 = vld [vmem:[%s278 + $0xb0] sm:$0xff]
      %v311 = vld [vmem:[%s278 + $0xb8] sm:$0xff]
      %v312 = vld [vmem:[%s278 + $0xc0] sm:$0xff]
      %v313 = vld [vmem:[%s278 + $0xc8] sm:$0xff]
      %v314 = vld [vmem:[%s278 + $0xd0] sm:$0xff]
      %v315 = vld [vmem:[%s278 + $0xd8] sm:$0xff]
      %v316 = vld [vmem:[%s278 + $0xe0] sm:$0xff]
      %v317 = vld [vmem:[%s278 + $0xe8] sm:$0xff]
      %v318 = vld [vmem:[%s278 + $0xf0] sm:$0xff]
      %v319 = vld [vmem:[%s278 + $0xf8] sm:$0xff]
      %v320 = vpack.c.bf16 %v292, %v288
      %v321 = vpack.c.bf16 %v293, %v289
      %v322 = vpack.c.bf16 %v294, %v290
      %v323 = vpack.c.bf16 %v295, %v291
      %v324 = vpack.c.bf16 %v300, %v296
      %v325 = vpack.c.bf16 %v301, %v297
      %v326 = vpack.c.bf16 %v302, %v298
      %v327 = vpack.c.bf16 %v303, %v299
      %v328 = vpack.c.bf16 %v308, %v304
      %v329 = vpack.c.bf16 %v309, %v305
      %v330 = vpack.c.bf16 %v310, %v306
      %v331 = vpack.c.bf16 %v311, %v307
      %v332 = vpack.c.bf16 %v316, %v312
      %v333 = vpack.c.bf16 %v317, %v313
      %v334 = vpack.c.bf16 %v318, %v314
      %v335 = vpack.c.bf16 %v319, %v315
      %v336 = vld [vmem:[%s1] sm:$0xf]
      %v337 = vld [vmem:[%s1 + $0x4] sm:$0xf]
      %v338 = vld [vmem:[%s1 + $0x8] sm:$0xf]
      %v339 = vld [vmem:[%s1 + $0xc] sm:$0xf]
      %v340 = vld [vmem:[%s1 + $0x10] sm:$0xf]
      %v341 = vld [vmem:[%s1 + $0x14] sm:$0xf]
      %v342 = vld [vmem:[%s1 + $0x18] sm:$0xf]
      %v343 = vld [vmem:[%s1 + $0x1c] sm:$0xf]
      %v344 = vld [vmem:[%s1 + $0x20] sm:$0xf]
      %v345 = vld [vmem:[%s1 + $0x24] sm:$0xf]
      %v346 = vld [vmem:[%s1 + $0x28] sm:$0xf]
      %v347 = vld [vmem:[%s1 + $0x2c] sm:$0xf]
      %v348 = vld [vmem:[%s1 + $0x30] sm:$0xf]
      %v349 = vld [vmem:[%s1 + $0x34] sm:$0xf]
      %v350 = vld [vmem:[%s1 + $0x38] sm:$0xf]
      %v351 = vld [vmem:[%s1 + $0x3c] sm:$0xf]
      %v352 = vld [vmem:[%s1 + $0x40] sm:$0xf]
      %v353 = vld [vmem:[%s1 + $0x44] sm:$0xf]
      %v354 = vld [vmem:[%s1 + $0x48] sm:$0xf]
      %v355 = vld [vmem:[%s1 + $0x4c] sm:$0xf]
      %v356 = vld [vmem:[%s1 + $0x50] sm:$0xf]
      %v357 = vld [vmem:[%s1 + $0x54] sm:$0xf]
      %v358 = vld [vmem:[%s1 + $0x58] sm:$0xf]
      %v359 = vld [vmem:[%s1 + $0x5c] sm:$0xf]
      %v360 = vld [vmem:[%s1 + $0x60] sm:$0xf]
      %v361 = vld [vmem:[%s1 + $0x64] sm:$0xf]
      %v362 = vld [vmem:[%s1 + $0x68] sm:$0xf]
      %v363 = vld [vmem:[%s1 + $0x6c] sm:$0xf]
      %v364 = vld [vmem:[%s1 + $0x70] sm:$0xf]
      %v365 = vld [vmem:[%s1 + $0x74] sm:$0xf]
      %v366 = vld [vmem:[%s1 + $0x78] sm:$0xf]
      %v367 = vld [vmem:[%s1 + $0x7c] sm:$0xf]
      %v368 = vld [vmem:[%s1 + $0x80] sm:$0xf]
      %v369 = vld [vmem:[%s1 + $0x84] sm:$0xf]
      %v370 = vld [vmem:[%s1 + $0x88] sm:$0xf]
      %v371 = vld [vmem:[%s1 + $0x8c] sm:$0xf]
      %v372 = vld [vmem:[%s1 + $0x90] sm:$0xf]
      %v373 = vld [vmem:[%s1 + $0x94] sm:$0xf]
      %v374 = vld [vmem:[%s1 + $0x98] sm:$0xf]
      %v375 = vld [vmem:[%s1 + $0x9c] sm:$0xf]
      %v376 = vld [vmem:[%s1 + $0xa0] sm:$0xf]
      %v377 = vld [vmem:[%s1 + $0xa4] sm:$0xf]
      %v378 = vld [vmem:[%s1 + $0xa8] sm:$0xf]
      %v379 = vld [vmem:[%s1 + $0xac] sm:$0xf]
      %v380 = vld [vmem:[%s1 + $0xb0] sm:$0xf]
      %v381 = vld [vmem:[%s1 + $0xb4] sm:$0xf]
      %v382 = vld [vmem:[%s1 + $0xb8] sm:$0xf]
      %v383 = vld [vmem:[%s1 + $0xbc] sm:$0xf]
      %v384 = vld [vmem:[%s1 + $0xc0] sm:$0xf]
      %v385 = vld [vmem:[%s1 + $0xc4] sm:$0xf]
      %v386 = vld [vmem:[%s1 + $0xc8] sm:$0xf]
      %v387 = vld [vmem:[%s1 + $0xcc] sm:$0xf]
      %v388 = vld [vmem:[%s1 + $0xd0] sm:$0xf]
      %v389 = vld [vmem:[%s1 + $0xd4] sm:$0xf]
      %v390 = vld [vmem:[%s1 + $0xd8] sm:$0xf]
      %v391 = vld [vmem:[%s1 + $0xdc] sm:$0xf]
      %v392 = vld [vmem:[%s1 + $0xe0] sm:$0xf]
      %v393 = vld [vmem:[%s1 + $0xe4] sm:$0xf]
      %v394 = vld [vmem:[%s1 + $0xe8] sm:$0xf]
      %v395 = vld [vmem:[%s1 + $0xec] sm:$0xf]
      %v396 = vld [vmem:[%s1 + $0xf0] sm:$0xf]
      %v397 = vld [vmem:[%s1 + $0xf4] sm:$0xf]
      %v398 = vld [vmem:[%s1 + $0xf8] sm:$0xf]
      %v399 = vld [vmem:[%s1 + $0xfc] sm:$0xf]
      %v400 = vld [vmem:[%s2] sm:$0x1]
      %v402 = vlaneseq
      %v403 = vshrl.u32 %v402, 7
      %v404 = vsub.s32 0, %v403
      %v405 = vrot.slane %v400, %v404
      %v471 = vunpack.c.l.b16 %v336
      %v472 = vunpack.c.l.b16 %v337
      %v473 = vunpack.c.l.b16 %v338
      %v474 = vunpack.c.l.b16 %v339
      %v475 = vunpack.c.l.b16 %v340
      %v476 = vunpack.c.l.b16 %v341
      %v477 = vunpack.c.l.b16 %v342
      %v478 = vunpack.c.l.b16 %v343
      %v479 = vunpack.c.l.b16 %v344
      %v480 = vunpack.c.l.b16 %v345
      %v481 = vunpack.c.l.b16 %v346
      %v482 = vunpack.c.l.b16 %v347
      %v483 = vunpack.c.l.b16 %v348
      %v484 = vunpack.c.l.b16 %v349
      %v485 = vunpack.c.l.b16 %v350
      %v486 = vunpack.c.l.b16 %v351
      %v487 = vunpack.c.l.b16 %v352
      %v488 = vunpack.c.l.b16 %v353
      %v489 = vunpack.c.l.b16 %v354
      %v490 = vunpack.c.l.b16 %v355
      %v491 = vunpack.c.l.b16 %v356
      %v492 = vunpack.c.l.b16 %v357
      %v493 = vunpack.c.l.b16 %v358
      %v494 = vunpack.c.l.b16 %v359
      %v495 = vunpack.c.l.b16 %v360
      %v496 = vunpack.c.l.b16 %v361
      %v497 = vunpack.c.l.b16 %v362
      %v498 = vunpack.c.l.b16 %v363
      %v499 = vunpack.c.l.b16 %v364
      %v500 = vunpack.c.l.b16 %v365
      %v501 = vunpack.c.l.b16 %v366
      %v502 = vunpack.c.l.b16 %v367
      %v503 = vunpack.c.l.b16 %v368
      %v504 = vunpack.c.l.b16 %v369
      %v505 = vunpack.c.l.b16 %v370
      %v506 = vunpack.c.l.b16 %v371
      %v507 = vunpack.c.l.b16 %v372
      %v508 = vunpack.c.l.b16 %v373
      %v509 = vunpack.c.l.b16 %v374
      %v510 = vunpack.c.l.b16 %v375
      %v511 = vunpack.c.l.b16 %v376
      %v512 = vunpack.c.l.b16 %v377
      %v513 = vunpack.c.l.b16 %v378
      %v514 = vunpack.c.l.b16 %v379
      %v515 = vunpack.c.l.b16 %v380
      %v516 = vunpack.c.l.b16 %v381
      %v517 = vunpack.c.l.b16 %v382
      %v518 = vunpack.c.l.b16 %v383
      %v519 = vunpack.c.l.b16 %v384
      %v520 = vunpack.c.l.b16 %v385
      %v521 = vunpack.c.l.b16 %v386
      %v522 = vunpack.c.l.b16 %v387
      %v523 = vunpack.c.l.b16 %v388
      %v524 = vunpack.c.l.b16 %v389
      %v525 = vunpack.c.l.b16 %v390
      %v526 = vunpack.c.l.b16 %v391
      %v527 = vunpack.c.l.b16 %v392
      %v528 = vunpack.c.l.b16 %v393
      %v529 = vunpack.c.l.b16 %v394
      %v530 = vunpack.c.l.b16 %v395
      %v531 = vunpack.c.l.b16 %v396
      %v532 = vunpack.c.l.b16 %v397
      %v533 = vunpack.c.l.b16 %v398
      %v534 = vunpack.c.l.b16 %v399
      %v535 = vpack.c.b16 %v472, %v471
      %v536 = vpack.c.b16 %v474, %v473
      %v537 = vpack.c.b16 %v476, %v475
      %v538 = vpack.c.b16 %v478, %v477
      %v539 = vpack.c.b16 %v480, %v479
      %v540 = vpack.c.b16 %v482, %v481
      %v541 = vpack.c.b16 %v484, %v483
      %v542 = vpack.c.b16 %v486, %v485
      %v543 = vpack.c.b16 %v488, %v487
      %v544 = vpack.c.b16 %v490, %v489
      %v545 = vpack.c.b16 %v492, %v491
      %v546 = vpack.c.b16 %v494, %v493
      %v547 = vpack.c.b16 %v496, %v495
      %v548 = vpack.c.b16 %v498, %v497
      %v549 = vpack.c.b16 %v500, %v499
      %v550 = vpack.c.b16 %v502, %v501
      %v551 = vpack.c.b16 %v504, %v503
      %v552 = vpack.c.b16 %v506, %v505
      %v553 = vpack.c.b16 %v508, %v507
      %v554 = vpack.c.b16 %v510, %v509
      %v555 = vpack.c.b16 %v512, %v511
      %v556 = vpack.c.b16 %v514, %v513
      %v557 = vpack.c.b16 %v516, %v515
      %v558 = vpack.c.b16 %v518, %v517
      %v559 = vpack.c.b16 %v520, %v519
      %v560 = vpack.c.b16 %v522, %v521
      %v561 = vpack.c.b16 %v524, %v523
      %v562 = vpack.c.b16 %v526, %v525
      %v563 = vpack.c.b16 %v528, %v527
      %v564 = vpack.c.b16 %v530, %v529
      %v565 = vpack.c.b16 %v532, %v531
      %v566 = vpack.c.b16 %v534, %v533
      %599 = vmatprep.subr.bf16.mxu0 0
      %600 = vmatpush1.bf16.msra.mxu0 %v542
      %601 = vmatprep.subr.bf16.mxu0 0
      %602 = vmatpush1.bf16.msra.mxu0 %v541
      %603 = vmatprep.subr.bf16.mxu0 0
      %604 = vmatpush1.bf16.msra.mxu0 %v540
      %605 = vmatprep.subr.bf16.mxu0 0
      %606 = vmatpush1.bf16.msra.mxu0 %v539
      %607 = vmatprep.subr.bf16.mxu0 0
      %608 = vmatpush1.bf16.msra.mxu0 %v538
      %609 = vmatprep.subr.bf16.mxu0 0
      %610 = vmatpush1.bf16.msra.mxu0 %v537
      %611 = vmatprep.subr.bf16.mxu0 0
      %612 = vmatpush1.bf16.msra.mxu0 %v536
      %613 = vmatprep.subr.bf16.mxu0 0
      %614 = vmatpush1.bf16.msra.mxu0 %v535
      %615 = vmatprep.subr.bf16.mxu0 0
      %616 = vmatpush2.bf16.msra.mxu0 %v550
      %617 = vmatprep.subr.bf16.mxu0 0
      %618 = vmatpush2.bf16.msra.mxu0 %v549
      %619 = vmatprep.subr.bf16.mxu0 0
      %620 = vmatpush2.bf16.msra.mxu0 %v548
      %621 = vmatprep.subr.bf16.mxu0 0
      %622 = vmatpush2.bf16.msra.mxu0 %v547
      %623 = vmatprep.subr.bf16.mxu0 0
      %624 = vmatpush2.bf16.msra.mxu0 %v546
      %625 = vmatprep.subr.bf16.mxu0 0
      %626 = vmatpush2.bf16.msra.mxu0 %v545
      %627 = vmatprep.subr.bf16.mxu0 0
      %628 = vmatpush2.bf16.msra.mxu0 %v544
      %629 = vmatprep.subr.bf16.mxu0 0
      %630 = vmatpush2.bf16.msra.mxu0 %v543
      %631 = vmatprep.mubr.bf16.mxu0 %v321
      %632 = vmatmul.mubr.bf16.gmra.mxu0 %v320
      %v633 = vpop.f32.mrf.mxu0
      %v634 = vadd.f32 %v405, %v633
      %v635 = vpop.f32.mrf.mxu0
      %v636 = vpop.f32.mrf.mxu0
      %v637 = vadd.f32 %v405, %v636
      %v638 = vpop.f32.mrf.mxu0
      %639 = vmatprep.mubr.bf16.mxu0 %v325
      %640 = vmatmul.mubr.bf16.gmra.mxu0 %v324
      %v641 = vpop.f32.mrf.mxu0
      %v642 = vadd.f32 %v405, %v641
      %v643 = vpop.f32.mrf.mxu0
      %v644 = vpop.f32.mrf.mxu0
      %v645 = vadd.f32 %v405, %v644
      %v646 = vpop.f32.mrf.mxu0
      %647 = vmatprep.mubr.bf16.mxu0 %v329
      %648 = vmatmul.mubr.bf16.gmra.mxu0 %v328
      %v649 = vpop.f32.mrf.mxu0
      %v650 = vadd.f32 %v405, %v649
      %v651 = vpop.f32.mrf.mxu0
      %v652 = vpop.f32.mrf.mxu0
      %v653 = vadd.f32 %v405, %v652
      %v654 = vpop.f32.mrf.mxu0
      %655 = vmatprep.mubr.bf16.mxu0 %v333
      %656 = vmatmul.mubr.bf16.gmra.mxu0 %v332
      %v657 = vpop.f32.mrf.mxu0
      %v658 = vadd.f32 %v405, %v657
      %v659 = vpop.f32.mrf.mxu0
      %v660 = vpop.f32.mrf.mxu0
      %v661 = vadd.f32 %v405, %v660
      %v662 = vpop.f32.mrf.mxu0
      %663 = vdwg.mxu0
      %664 = vmatprep.subr.bf16.mxu0 0
      %665 = vmatpush1.bf16.msra.mxu0 %v558
      %666 = vmatprep.subr.bf16.mxu0 0
      %667 = vmatpush1.bf16.msra.mxu0 %v557
      %668 = vmatprep.subr.bf16.mxu0 0
      %669 = vmatpush1.bf16.msra.mxu0 %v556
      %670 = vmatprep.subr.bf16.mxu0 0
      %671 = vmatpush1.bf16.msra.mxu0 %v555
      %672 = vmatprep.subr.bf16.mxu0 0
      %673 = vmatpush1.bf16.msra.mxu0 %v554
      %674 = vmatprep.subr.bf16.mxu0 0
      %675 = vmatpush1.bf16.msra.mxu0 %v553
      %676 = vmatprep.subr.bf16.mxu0 0
      %677 = vmatpush1.bf16.msra.mxu0 %v552
      %678 = vmatprep.subr.bf16.mxu0 0
      %679 = vmatpush1.bf16.msra.mxu0 %v551
      %680 = vmatprep.subr.bf16.mxu0 0
      %681 = vmatpush2.bf16.msra.mxu0 %v566
      %682 = vmatprep.subr.bf16.mxu0 0
      %683 = vmatpush2.bf16.msra.mxu0 %v565
      %684 = vmatprep.subr.bf16.mxu0 0
      %685 = vmatpush2.bf16.msra.mxu0 %v564
      %686 = vmatprep.subr.bf16.mxu0 0
      %687 = vmatpush2.bf16.msra.mxu0 %v563
      %688 = vmatprep.subr.bf16.mxu0 0
      %689 = vmatpush2.bf16.msra.mxu0 %v562
      %690 = vmatprep.subr.bf16.mxu0 0
      %691 = vmatpush2.bf16.msra.mxu0 %v561
      %692 = vmatprep.subr.bf16.mxu0 0
      %693 = vmatpush2.bf16.msra.mxu0 %v560
      %694 = vmatprep.subr.bf16.mxu0 0
      %695 = vmatpush2.bf16.msra.mxu0 %v559
      %696 = vmatprep.mubr.bf16.mxu0 %v323
      %697 = vmatmul.mubr.bf16.gmra.mxu0 %v322
      %v698 = vpop.f32.mrf.mxu0
      %v699 = vadd.f32 %v634, %v698
      %v700 = vpop.f32.mrf.mxu0
      %v701 = vpop.f32.mrf.mxu0
      %v702 = vadd.f32 %v637, %v701
      %v703 = vpop.f32.mrf.mxu0
      %704 = vmatprep.mubr.bf16.mxu0 %v327
      %705 = vmatmul.mubr.bf16.gmra.mxu0 %v326
      %v706 = vpop.f32.mrf.mxu0
      %v707 = vadd.f32 %v642, %v706
      %v708 = vpop.f32.mrf.mxu0
      %v709 = vpop.f32.mrf.mxu0
      %v710 = vadd.f32 %v645, %v709
      %v711 = vpop.f32.mrf.mxu0
      %712 = vmatprep.mubr.bf16.mxu0 %v331
      %713 = vmatmul.mubr.bf16.gmra.mxu0 %v330
      %v714 = vpop.f32.mrf.mxu0
      %v715 = vadd.f32 %v650, %v714
      %v716 = vpop.f32.mrf.mxu0
      %v717 = vpop.f32.mrf.mxu0
      %v718 = vadd.f32 %v653, %v717
      %v719 = vpop.f32.mrf.mxu0
      %720 = vmatprep.mubr.bf16.mxu0 %v335
      %721 = vmatmul.mubr.bf16.gmra.mxu0 %v334
      %v722 = vpop.f32.mrf.mxu0
      %v723 = vadd.f32 %v658, %v722
      %v724 = vpop.f32.mrf.mxu0
      %v725 = vpop.f32.mrf.mxu0
      %v726 = vadd.f32 %v661, %v725
      %v727 = vpop.f32.mrf.mxu0
      %728 = vdwg.mxu0
      %v729 = vmax.f32 %v699, 0.0
      %v730 = vmax.f32 %v702, 0.0
      %v731 = vmax.f32 %v707, 0.0
      %v732 = vmax.f32 %v710, 0.0
      %v733 = vmax.f32 %v715, 0.0
      %v734 = vmax.f32 %v718, 0.0
      %v735 = vmax.f32 %v723, 0.0
      %v736 = vmax.f32 %v726, 0.0
      %vm737 = vcmask 1040384
      %vm738 = vsmask.f32 256
      %vm739 = vmand %vm737, %vm738
      %v740 = vld [vmem:[#allocation2] sm:$0x1]
      %v741 = vsel %vm739, 0, %v740
      %742 = vst [vmem:[#allocation2] sm:$0x1] %v741
      %v743 = vld [vmem:[#allocation2 + $0xc] sm:$0x1]
      %v744 = vsel %vm739, 0, %v743
      %745 = vst [vmem:[#allocation2 + $0xc] sm:$0x1] %v744
      %v746 = vld [vmem:[#allocation2 + $0x18] sm:$0x1]
      %v747 = vsel %vm739, 0, %v746
      %748 = vst [vmem:[#allocation2 + $0x18] sm:$0x1] %v747
      %v749 = vld [vmem:[#allocation2 + $0x24] sm:$0x1]
      %v750 = vsel %vm739, 0, %v749
      %751 = vst [vmem:[#allocation2 + $0x24] sm:$0x1] %v750
      %vm752 = vsmask.f32 7938
      %vm753 = vmand %vm737, %vm752
      %v754 = vld [vmem:[#allocation2 + $0x8] sm:$0x1]
      %v755 = vsel %vm753, 0, %v754
      %756 = vst [vmem:[#allocation2 + $0x8] sm:$0x1] %v755
      %v757 = vld [vmem:[#allocation2 + $0x14] sm:$0x1]
      %v758 = vsel %vm753, 0, %v757
      %759 = vst [vmem:[#allocation2 + $0x14] sm:$0x1] %v758
      %v760 = vld [vmem:[#allocation2 + $0x20] sm:$0x1]
      %v761 = vsel %vm753, 0, %v760
      %762 = vst [vmem:[#allocation2 + $0x20] sm:$0x1] %v761
      %v763 = vld [vmem:[#allocation2 + $0x2c] sm:$0x1]
      %v764 = vsel %vm753, 0, %v763
      %765 = vst [vmem:[#allocation2 + $0x2c] sm:$0x1] %v764
      %v766 = vpack.c.bf16 %v730, %v729
      %v767 = vpack.c.bf16 %v732, %v731
      %v768 = vpack.c.bf16 %v734, %v733
      %v769 = vpack.c.bf16 %v736, %v735
      %v774 = vunpack.c.l.b16 %v766
      %v775 = vunpack.c.h.b16 %v766
      %v776 = vunpack.c.l.b16 %v767
      %v777 = vunpack.c.h.b16 %v767
      %v778 = vunpack.c.l.b16 %v768
      %v779 = vunpack.c.h.b16 %v768
      %v780 = vunpack.c.l.b16 %v769
      %v781 = vunpack.c.h.b16 %v769
      %v782 = vpack.c.b16 %v774, %v774
      %v783 = vpack.c.b16 %v775, %v775
      %v784 = vpack.c.b16 %v776, %v776
      %v785 = vpack.c.b16 %v777, %v777
      %v786 = vpack.c.b16 %v778, %v778
      %v787 = vpack.c.b16 %v779, %v779
      %v788 = vpack.c.b16 %v780, %v780
      %v789 = vpack.c.b16 %v781, %v781
      %vm790 = vsmask.f32 4368
      %vm791 = vmor %vm738, %vm790
      %v793 = vshrl.u32 %v782, 16
      %v795 = vrot.slane %v793, 7
      %v796 = vshll.u32 %v782, 16
      %v798 = vor.u32 %v795, %v796
      %v799 = vrot.slane %v795, 4
      %v801 = vshrl.u32 %v783, 16
      %v803 = vrot.slane %v801, 7
      %v804 = vshll.u32 %v783, 16
      %v806 = vor.u32 %v803, %v804
      %v807 = vsel %vm791, %v799, %v806
      %v808 = vrot.slane %v803, 4
      %v810 = vshrl.u32 %v784, 16
      %v812 = vrot.slane %v810, 7
      %v813 = vshll.u32 %v784, 16
      %v815 = vor.u32 %v812, %v813
      %v816 = vrot.slane %v812, 4
      %v818 = vshrl.u32 %v785, 16
      %v820 = vrot.slane %v818, 7
      %v821 = vshll.u32 %v785, 16
      %v823 = vor.u32 %v820, %v821
      %v824 = vsel %vm791, %v816, %v823
      %v825 = vrot.slane %v820, 4
      %v827 = vshrl.u32 %v786, 16
      %v829 = vrot.slane %v827, 7
      %v830 = vshll.u32 %v786, 16
      %v832 = vor.u32 %v829, %v830
      %v833 = vrot.slane %v829, 4
      %v835 = vshrl.u32 %v787, 16
      %v837 = vrot.slane %v835, 7
      %v838 = vshll.u32 %v787, 16
      %v840 = vor.u32 %v837, %v838
      %v841 = vsel %vm791, %v833, %v840
      %v842 = vrot.slane %v837, 4
      %v844 = vshrl.u32 %v788, 16
      %v846 = vrot.slane %v844, 7
      %v847 = vshll.u32 %v788, 16
      %v849 = vor.u32 %v846, %v847
      %v850 = vrot.slane %v846, 4
      %v852 = vshrl.u32 %v789, 16
      %v854 = vrot.slane %v852, 7
      %v855 = vshll.u32 %v789, 16
      %v857 = vor.u32 %v854, %v855
      %v858 = vsel %vm791, %v850, %v857
      %v859 = vrot.slane %v854, 4
      %vm872 = vcmask 1043456
      %vm873 = vmand %vm872, %vm752
      %v874 = vld [vmem:[#allocation2] sm:$0xf]
      %v875 = vsel %vm873, %v798, %v874
      %876 = vst [vmem:[#allocation2] sm:$0xf] %v875
      %877 = vst [vmem:[#allocation2 + $0x4] sm:$0xf] %v807
      %v878 = vld [vmem:[#allocation2 + $0x8] sm:$0x1]
      %v879 = vsel %vm739, %v808, %v878
      %880 = vst [vmem:[#allocation2 + $0x8] sm:$0x1] %v879
      %v881 = vld [vmem:[#allocation2 + $0xc] sm:$0xf]
      %v882 = vsel %vm873, %v815, %v881
      %883 = vst [vmem:[#allocation2 + $0xc] sm:$0xf] %v882
      %884 = vst [vmem:[#allocation2 + $0x10] sm:$0xf] %v824
      %v885 = vld [vmem:[#allocation2 + $0x14] sm:$0x1]
      %v886 = vsel %vm739, %v825, %v885
      %887 = vst [vmem:[#allocation2 + $0x14] sm:$0x1] %v886
      %v888 = vld [vmem:[#allocation2 + $0x18] sm:$0xf]
      %v889 = vsel %vm873, %v832, %v888
      %890 = vst [vmem:[#allocation2 + $0x18] sm:$0xf] %v889
      %891 = vst [vmem:[#allocation2 + $0x1c] sm:$0xf] %v841
      %v892 = vld [vmem:[#allocation2 + $0x20] sm:$0x1]
      %v893 = vsel %vm739, %v842, %v892
      %894 = vst [vmem:[#allocation2 + $0x20] sm:$0x1] %v893
      %v895 = vld [vmem:[#allocation2 + $0x24] sm:$0xf]
      %v896 = vsel %vm873, %v849, %v895
      %897 = vst [vmem:[#allocation2 + $0x24] sm:$0xf] %v896
      %898 = vst [vmem:[#allocation2 + $0x28] sm:$0xf] %v858
      %v899 = vld [vmem:[#allocation2 + $0x2c] sm:$0x1]
      %v900 = vsel %vm739, %v859, %v899
      %901 = vst [vmem:[#allocation2 + $0x2c] sm:$0x1] %v900
      %v902 = vld [vmem:[#allocation2] sm:$0xf]
      %v903 = vld [vmem:[#allocation2 + $0x4] sm:$0xf]
      %v904 = vld [vmem:[#allocation2 + $0xc] sm:$0xf]
      %v905 = vld [vmem:[#allocation2 + $0x10] sm:$0xf]
      %v906 = vld [vmem:[#allocation2 + $0x18] sm:$0xf]
      %v907 = vld [vmem:[#allocation2 + $0x1c] sm:$0xf]
      %v908 = vld [vmem:[#allocation2 + $0x24] sm:$0xf]
      %v909 = vld [vmem:[#allocation2 + $0x28] sm:$0xf]
      %v910 = vld [vmem:[%s3] sm:$0xf]
      %v911 = vld [vmem:[%s3 + $0x4] sm:$0xf]
      %v912 = vld [vmem:[%s3 + $0x8] sm:$0xf]
      %v913 = vld [vmem:[%s3 + $0xc] sm:$0xf]
      %v914 = vld [vmem:[%s3 + $0x10] sm:$0xf]
      %v915 = vld [vmem:[%s3 + $0x14] sm:$0xf]
      %v916 = vld [vmem:[%s3 + $0x18] sm:$0xf]
      %v917 = vld [vmem:[%s3 + $0x1c] sm:$0xf]
      %v918 = vld [vmem:[%s3 + $0x20] sm:$0xf]
      %v919 = vld [vmem:[%s3 + $0x24] sm:$0xf]
      %v920 = vld [vmem:[%s3 + $0x28] sm:$0xf]
      %v921 = vld [vmem:[%s3 + $0x2c] sm:$0xf]
      %v922 = vld [vmem:[%s3 + $0x30] sm:$0xf]
      %v923 = vld [vmem:[%s3 + $0x34] sm:$0xf]
      %v924 = vld [vmem:[%s3 + $0x38] sm:$0xf]
      %v925 = vld [vmem:[%s3 + $0x3c] sm:$0xf]
      %v926 = vld [vmem:[#allocation2 + $0x8] sm:$0x1]
      %v927 = vld [vmem:[#allocation2 + $0x14] sm:$0x1]
      %v928 = vld [vmem:[#allocation2 + $0x20] sm:$0x1]
      %v929 = vld [vmem:[#allocation2 + $0x2c] sm:$0x1]
      %vm930 = vsmask.f32 3328
      %vm931 = vsmask.f32 7440
      %vm932 = vmor %vm930, %vm931
      %v934 = vshrl.u32 %v902, 16
      %v936 = vrot.slane %v934, 4
      %v937 = vshll.u32 %v902, 16
      %v939 = vrot.slane %v937, 5
      %v940 = vor.u32 %v936, %v939
      %v941 = vrot.slane %v940, 4
      %v943 = vshll.u32 %v903, 16
      %v945 = vrot.slane %v943, 5
      %v946 = vsel %vm932, %v941, %v945
      %v947 = vshrl.u32 %v903, 16
      %v949 = vrot.slane %v947, 4
      %v950 = vor.u32 %v949, %v945
      %v951 = vrot.slane %v950, 4
      %v953 = vshll.u32 %v926, 16
      %v955 = vrot.slane %v953, 5
      %v956 = vsel %vm932, %v951, %v955
      %v958 = vshrl.u32 %v904, 16
      %v960 = vrot.slane %v958, 4
      %v961 = vshll.u32 %v904, 16
      %v963 = vrot.slane %v961, 5
      %v964 = vor.u32 %v960, %v963
      %v965 = vrot.slane %v964, 4
      %v967 = vshll.u32 %v905, 16
      %v969 = vrot.slane %v967, 5
      %v970 = vsel %vm932, %v965, %v969
      %v971 = vshrl.u32 %v905, 16
      %v973 = vrot.slane %v971, 4
      %v974 = vor.u32 %v973, %v969
      %v975 = vrot.slane %v974, 4
      %v977 = vshll.u32 %v927, 16
      %v979 = vrot.slane %v977, 5
      %v980 = vsel %vm932, %v975, %v979
      %v982 = vshrl.u32 %v906, 16
      %v984 = vrot.slane %v982, 4
      %v985 = vshll.u32 %v906, 16
      %v987 = vrot.slane %v985, 5
      %v988 = vor.u32 %v984, %v987
      %v989 = vrot.slane %v988, 4
      %v991 = vshll.u32 %v907, 16
      %v993 = vrot.slane %v991, 5
      %v994 = vsel %vm932, %v989, %v993
      %v995 = vshrl.u32 %v907, 16
      %v997 = vrot.slane %v995, 4
      %v998 = vor.u32 %v997, %v993
      %v999 = vrot.slane %v998, 4
      %v1001 = vshll.u32 %v928, 16
      %v1003 = vrot.slane %v1001, 5
      %v1004 = vsel %vm932, %v999, %v1003
      %v1006 = vshrl.u32 %v908, 16
      %v1008 = vrot.slane %v1006, 4
      %v1009 = vshll.u32 %v908, 16
      %v1011 = vrot.slane %v1009, 5
      %v1012 = vor.u32 %v1008, %v1011
      %v1013 = vrot.slane %v1012, 4
      %v1015 = vshll.u32 %v909, 16
      %v1017 = vrot.slane %v1015, 5
      %v1018 = vsel %vm932, %v1013, %v1017
      %v1019 = vshrl.u32 %v909, 16
      %v1021 = vrot.slane %v1019, 4
      %v1022 = vor.u32 %v1021, %v1017
      %v1023 = vrot.slane %v1022, 4
      %v1025 = vshll.u32 %v929, 16
      %v1027 = vrot.slane %v1025, 5
      %v1028 = vsel %vm932, %v1023, %v1027
      %s1029 = scalar_lea.vmem %s3, 64
      %v1030 = vld [vmem:[%s1029] sm:$0xf]
      %v1031 = vld [vmem:[%s1029 + $0x4] sm:$0xf]
      %v1032 = vld [vmem:[%s1029 + $0x8] sm:$0xf]
      %v1033 = vld [vmem:[%s1029 + $0xc] sm:$0xf]
      %v1034 = vld [vmem:[%s1029 + $0x10] sm:$0xf]
      %v1035 = vld [vmem:[%s1029 + $0x14] sm:$0xf]
      %v1036 = vld [vmem:[%s1029 + $0x18] sm:$0xf]
      %v1037 = vld [vmem:[%s1029 + $0x1c] sm:$0xf]
      %v1038 = vld [vmem:[%s1029 + $0x20] sm:$0xf]
      %v1039 = vld [vmem:[%s1029 + $0x24] sm:$0xf]
      %v1040 = vld [vmem:[%s1029 + $0x28] sm:$0xf]
      %v1041 = vld [vmem:[%s1029 + $0x2c] sm:$0xf]
      %v1042 = vld [vmem:[%s1029 + $0x30] sm:$0xf]
      %v1043 = vld [vmem:[%s1029 + $0x34] sm:$0xf]
      %v1044 = vld [vmem:[%s1029 + $0x38] sm:$0xf]
      %v1045 = vld [vmem:[%s1029 + $0x3c] sm:$0xf]
      %v1046 = vunpack.c.l.b16 %v946
      %v1047 = vunpack.c.l.b16 %v956
      %v1048 = vunpack.c.l.b16 %v970
      %v1049 = vunpack.c.l.b16 %v980
      %v1050 = vunpack.c.l.b16 %v994
      %v1051 = vunpack.c.l.b16 %v1004
      %v1052 = vunpack.c.l.b16 %v1018
      %v1053 = vunpack.c.l.b16 %v1028
      %v1054 = vpack.c.b16 %v1047, %v1046
      %v1055 = vpack.c.b16 %v1049, %v1048
      %v1056 = vpack.c.b16 %v1051, %v1050
      %v1057 = vpack.c.b16 %v1053, %v1052
      %v1078 = vunpack.c.l.b16 %v1030
      %v1079 = vunpack.c.l.b16 %v1031
      %v1080 = vunpack.c.l.b16 %v1032
      %v1081 = vunpack.c.l.b16 %v1033
      %v1082 = vunpack.c.l.b16 %v1034
      %v1083 = vunpack.c.l.b16 %v1035
      %v1084 = vunpack.c.l.b16 %v1036
      %v1085 = vunpack.c.l.b16 %v1037
      %v1086 = vunpack.c.l.b16 %v1038
      %v1087 = vunpack.c.l.b16 %v1039
      %v1088 = vunpack.c.l.b16 %v1040
      %v1089 = vunpack.c.l.b16 %v1041
      %v1090 = vunpack.c.l.b16 %v1042
      %v1091 = vunpack.c.l.b16 %v1043
      %v1092 = vunpack.c.l.b16 %v1044
      %v1093 = vunpack.c.l.b16 %v1045
      %v1094 = vpack.c.b16 %v1079, %v1078
      %v1095 = vpack.c.b16 %v1081, %v1080
      %v1096 = vpack.c.b16 %v1083, %v1082
      %v1097 = vpack.c.b16 %v1085, %v1084
      %v1098 = vpack.c.b16 %v1087, %v1086
      %v1099 = vpack.c.b16 %v1089, %v1088
      %v1100 = vpack.c.b16 %v1091, %v1090
      %v1101 = vpack.c.b16 %v1093, %v1092
      %1110 = vmatprep.subr.bf16.mxu0 0
      %1111 = vmatpush1.bf16.msra.mxu0 %v1101
      %1112 = vmatprep.subr.bf16.mxu0 0
      %1113 = vmatpush1.bf16.msra.mxu0 %v1100
      %1114 = vmatprep.subr.bf16.mxu0 0
      %1115 = vmatpush1.bf16.msra.mxu0 %v1099
      %1116 = vmatprep.subr.bf16.mxu0 0
      %1117 = vmatpush1.bf16.msra.mxu0 %v1098
      %1118 = vmatprep.subr.bf16.mxu0 0
      %1119 = vmatpush1.bf16.msra.mxu0 %v1097
      %1120 = vmatprep.subr.bf16.mxu0 0
      %1121 = vmatpush1.bf16.msra.mxu0 %v1096
      %1122 = vmatprep.subr.bf16.mxu0 0
      %1123 = vmatpush1.bf16.msra.mxu0 %v1095
      %1124 = vmatprep.subr.bf16.mxu0 0
      %1125 = vmatpush1.bf16.msra.mxu0 %v1094
      %1126 = vmatprep.subr.bf16.mxu0 0
      %1127 = vmatpush2.bf16.msra.mxu0 0
      %1128 = vmatprep.subr.bf16.mxu0 0
      %1129 = vmatpush2.bf16.msra.mxu0 0
      %1130 = vmatprep.subr.bf16.mxu0 0
      %1131 = vmatpush2.bf16.msra.mxu0 0
      %1132 = vmatprep.subr.bf16.mxu0 0
      %1133 = vmatpush2.bf16.msra.mxu0 0
      %1134 = vmatprep.subr.bf16.mxu0 0
      %1135 = vmatpush2.bf16.msra.mxu0 0
      %1136 = vmatprep.subr.bf16.mxu0 0
      %1137 = vmatpush2.bf16.msra.mxu0 0
      %1138 = vmatprep.subr.bf16.mxu0 0
      %1139 = vmatpush2.bf16.msra.mxu0 0
      %1140 = vmatprep.subr.bf16.mxu0 0
      %1141 = vmatpush2.bf16.msra.mxu0 0
      %1142 = vmatprep.mubr.bf16.mxu0 0
      %1143 = vmatmul.mubr.bf16.gmra.mxu0 %v1054
      %v1144 = vpop.f32.mrf.mxu0
      %v1145 = vadd.f32 0.0, %v1144
      %v1146 = vpop.f32.mrf.mxu0
      %v1147 = vpop.f32.mrf.mxu0
      %v1148 = vadd.f32 0.0, %v1147
      %v1149 = vpop.f32.mrf.mxu0
      %1150 = vmatprep.mubr.bf16.mxu0 0
      %1151 = vmatmul.mubr.bf16.gmra.mxu0 %v1055
      %v1152 = vpop.f32.mrf.mxu0
      %v1153 = vadd.f32 0.0, %v1152
      %v1154 = vpop.f32.mrf.mxu0
      %v1155 = vpop.f32.mrf.mxu0
      %v1156 = vadd.f32 0.0, %v1155
      %v1157 = vpop.f32.mrf.mxu0
      %1158 = vmatprep.mubr.bf16.mxu0 0
      %1159 = vmatmul.mubr.bf16.gmra.mxu0 %v1056
      %v1160 = vpop.f32.mrf.mxu0
      %v1161 = vadd.f32 0.0, %v1160
      %v1162 = vpop.f32.mrf.mxu0
      %v1163 = vpop.f32.mrf.mxu0
      %v1164 = vadd.f32 0.0, %v1163
      %v1165 = vpop.f32.mrf.mxu0
      %1166 = vmatprep.mubr.bf16.mxu0 0
      %1167 = vmatmul.mubr.bf16.gmra.mxu0 %v1057
      %v1168 = vpop.f32.mrf.mxu0
      %v1169 = vadd.f32 0.0, %v1168
      %v1170 = vpop.f32.mrf.mxu0
      %v1171 = vpop.f32.mrf.mxu0
      %v1172 = vadd.f32 0.0, %v1171
      %v1173 = vpop.f32.mrf.mxu0
      %1174 = vdwg.mxu0
      %v1183 = vunpack.c.l.b16 %v902
      %v1184 = vunpack.c.l.b16 %v903
      %v1185 = vunpack.c.l.b16 %v904
      %v1186 = vunpack.c.l.b16 %v905
      %v1187 = vunpack.c.l.b16 %v906
      %v1188 = vunpack.c.l.b16 %v907
      %v1189 = vunpack.c.l.b16 %v908
      %v1190 = vunpack.c.l.b16 %v909
      %v1191 = vpack.c.b16 %v1184, %v1183
      %v1192 = vpack.c.b16 %v1186, %v1185
      %v1193 = vpack.c.b16 %v1188, %v1187
      %v1194 = vpack.c.b16 %v1190, %v1189
      %v1215 = vunpack.c.l.b16 %v910
      %v1216 = vunpack.c.l.b16 %v911
      %v1217 = vunpack.c.l.b16 %v912
      %v1218 = vunpack.c.l.b16 %v913
      %v1219 = vunpack.c.l.b16 %v914
      %v1220 = vunpack.c.l.b16 %v915
      %v1221 = vunpack.c.l.b16 %v916
      %v1222 = vunpack.c.l.b16 %v917
      %v1223 = vunpack.c.l.b16 %v918
      %v1224 = vunpack.c.l.b16 %v919
      %v1225 = vunpack.c.l.b16 %v920
      %v1226 = vunpack.c.l.b16 %v921
      %v1227 = vunpack.c.l.b16 %v922
      %v1228 = vunpack.c.l.b16 %v923
      %v1229 = vunpack.c.l.b16 %v924
      %v1230 = vunpack.c.l.b16 %v925
      %v1231 = vpack.c.b16 %v1216, %v1215
      %v1232 = vpack.c.b16 %v1218, %v1217
      %v1233 = vpack.c.b16 %v1220, %v1219
      %v1234 = vpack.c.b16 %v1222, %v1221
      %v1235 = vpack.c.b16 %v1224, %v1223
      %v1236 = vpack.c.b16 %v1226, %v1225
      %v1237 = vpack.c.b16 %v1228, %v1227
      %v1238 = vpack.c.b16 %v1230, %v1229
      %1247 = vmatprep.subr.bf16.mxu0 0
      %1248 = vmatpush1.bf16.msra.mxu0 %v1238
      %1249 = vmatprep.subr.bf16.mxu0 0
      %1250 = vmatpush1.bf16.msra.mxu0 %v1237
      %1251 = vmatprep.subr.bf16.mxu0 0
      %1252 = vmatpush1.bf16.msra.mxu0 %v1236
      %1253 = vmatprep.subr.bf16.mxu0 0
      %1254 = vmatpush1.bf16.msra.mxu0 %v1235
      %1255 = vmatprep.subr.bf16.mxu0 0
      %1256 = vmatpush1.bf16.msra.mxu0 %v1234
      %1257 = vmatprep.subr.bf16.mxu0 0
      %1258 = vmatpush1.bf16.msra.mxu0 %v1233
      %1259 = vmatprep.subr.bf16.mxu0 0
      %1260 = vmatpush1.bf16.msra.mxu0 %v1232
      %1261 = vmatprep.subr.bf16.mxu0 0
      %1262 = vmatpush1.bf16.msra.mxu0 %v1231
      %1263 = vmatprep.subr.bf16.mxu0 0
      %1264 = vmatpush2.bf16.msra.mxu0 0
      %1265 = vmatprep.subr.bf16.mxu0 0
      %1266 = vmatpush2.bf16.msra.mxu0 0
      %1267 = vmatprep.subr.bf16.mxu0 0
      %1268 = vmatpush2.bf16.msra.mxu0 0
      %1269 = vmatprep.subr.bf16.mxu0 0
      %1270 = vmatpush2.bf16.msra.mxu0 0
      %1271 = vmatprep.subr.bf16.mxu0 0
      %1272 = vmatpush2.bf16.msra.mxu0 0
      %1273 = vmatprep.subr.bf16.mxu0 0
      %1274 = vmatpush2.bf16.msra.mxu0 0
      %1275 = vmatprep.subr.bf16.mxu0 0
      %1276 = vmatpush2.bf16.msra.mxu0 0
      %1277 = vmatprep.subr.bf16.mxu0 0
      %1278 = vmatpush2.bf16.msra.mxu0 0
      %1279 = vmatprep.mubr.bf16.mxu0 0
      %1280 = vmatmul.mubr.bf16.gmra.mxu0 %v1191
      %v1281 = vpop.f32.mrf.mxu0
      %v1282 = vadd.f32 %v1145, %v1281
      %v1283 = vpop.f32.mrf.mxu0
      %v1284 = vpop.f32.mrf.mxu0
      %v1285 = vadd.f32 %v1148, %v1284
      %v1286 = vpop.f32.mrf.mxu0
      %1287 = vmatprep.mubr.bf16.mxu0 0
      %1288 = vmatmul.mubr.bf16.gmra.mxu0 %v1192
      %v1289 = vpop.f32.mrf.mxu0
      %v1290 = vadd.f32 %v1153, %v1289
      %v1291 = vpop.f32.mrf.mxu0
      %v1292 = vpop.f32.mrf.mxu0
      %v1293 = vadd.f32 %v1156, %v1292
      %v1294 = vpop.f32.mrf.mxu0
      %1295 = vmatprep.mubr.bf16.mxu0 0
      %1296 = vmatmul.mubr.bf16.gmra.mxu0 %v1193
      %v1297 = vpop.f32.mrf.mxu0
      %v1298 = vadd.f32 %v1161, %v1297
      %v1299 = vpop.f32.mrf.mxu0
      %v1300 = vpop.f32.mrf.mxu0
      %v1301 = vadd.f32 %v1164, %v1300
      %v1302 = vpop.f32.mrf.mxu0
      %1303 = vmatprep.mubr.bf16.mxu0 0
      %1304 = vmatmul.mubr.bf16.gmra.mxu0 %v1194
      %v1305 = vpop.f32.mrf.mxu0
      %v1306 = vadd.f32 %v1169, %v1305
      %v1307 = vpop.f32.mrf.mxu0
      %v1308 = vpop.f32.mrf.mxu0
      %v1309 = vadd.f32 %v1172, %v1308
      %v1310 = vpop.f32.mrf.mxu0
      %1311 = vdwg.mxu0
      %v1312 = vld [vmem:[#allocation2] sm:$0xe]
      %v1313 = vld [vmem:[#allocation2 + $0xc] sm:$0xe]
      %v1314 = vld [vmem:[#allocation2 + $0x18] sm:$0xe]
      %v1315 = vld [vmem:[#allocation2 + $0x24] sm:$0xe]
      %vm1324 = vcmask 1042432
      %vm1325 = vcmask 1046532
      %vm1326 = vmor %vm1324, %vm1325
      %v1327 = vrot.slane %v1312, 5
      %v1328 = vrot.slane %v1327, 4
      %v1329 = vrot.slane %v903, 5
      %v1330 = vsel %vm1326, %v1328, %v1329
      %v1331 = vrot.slane %v1329, 4
      %v1332 = vrot.slane %v926, 5
      %v1333 = vsel %vm1326, %v1331, %v1332
      %v1334 = vrot.slane %v1313, 5
      %v1335 = vrot.slane %v1334, 4
      %v1336 = vrot.slane %v905, 5
      %v1337 = vsel %vm1326, %v1335, %v1336
      %v1338 = vrot.slane %v1336, 4
      %v1339 = vrot.slane %v927, 5
      %v1340 = vsel %vm1326, %v1338, %v1339
      %v1341 = vrot.slane %v1314, 5
      %v1342 = vrot.slane %v1341, 4
      %v1343 = vrot.slane %v907, 5
      %v1344 = vsel %vm1326, %v1342, %v1343
      %v1345 = vrot.slane %v1343, 4
      %v1346 = vrot.slane %v928, 5
      %v1347 = vsel %vm1326, %v1345, %v1346
      %v1348 = vrot.slane %v1315, 5
      %v1349 = vrot.slane %v1348, 4
      %v1350 = vrot.slane %v909, 5
      %v1351 = vsel %vm1326, %v1349, %v1350
      %v1352 = vrot.slane %v1350, 4
      %v1353 = vrot.slane %v929, 5
      %v1354 = vsel %vm1326, %v1352, %v1353
      %s1355 = scalar_lea.vmem %s3, 128
      %v1356 = vld [vmem:[%s1355] sm:$0xf]
      %v1357 = vld [vmem:[%s1355 + $0x4] sm:$0xf]
      %v1358 = vld [vmem:[%s1355 + $0x8] sm:$0xf]
      %v1359 = vld [vmem:[%s1355 + $0xc] sm:$0xf]
      %v1360 = vld [vmem:[%s1355 + $0x10] sm:$0xf]
      %v1361 = vld [vmem:[%s1355 + $0x14] sm:$0xf]
      %v1362 = vld [vmem:[%s1355 + $0x18] sm:$0xf]
      %v1363 = vld [vmem:[%s1355 + $0x1c] sm:$0xf]
      %v1364 = vld [vmem:[%s1355 + $0x20] sm:$0xf]
      %v1365 = vld [vmem:[%s1355 + $0x24] sm:$0xf]
      %v1366 = vld [vmem:[%s1355 + $0x28] sm:$0xf]
      %v1367 = vld [vmem:[%s1355 + $0x2c] sm:$0xf]
      %v1368 = vld [vmem:[%s1355 + $0x30] sm:$0xf]
      %v1369 = vld [vmem:[%s1355 + $0x34] sm:$0xf]
      %v1370 = vld [vmem:[%s1355 + $0x38] sm:$0xf]
      %v1371 = vld [vmem:[%s1355 + $0x3c] sm:$0xf]
      %v1372 = vunpack.c.l.b16 %v1330
      %v1373 = vunpack.c.l.b16 %v1333
      %v1374 = vunpack.c.l.b16 %v1337
      %v1375 = vunpack.c.l.b16 %v1340
      %v1376 = vunpack.c.l.b16 %v1344
      %v1377 = vunpack.c.l.b16 %v1347
      %v1378 = vunpack.c.l.b16 %v1351
      %v1379 = vunpack.c.l.b16 %v1354
      %v1380 = vpack.c.b16 %v1373, %v1372
      %v1381 = vpack.c.b16 %v1375, %v1374
      %v1382 = vpack.c.b16 %v1377, %v1376
      %v1383 = vpack.c.b16 %v1379, %v1378
      %v1404 = vunpack.c.l.b16 %v1356
      %v1405 = vunpack.c.l.b16 %v1357
      %v1406 = vunpack.c.l.b16 %v1358
      %v1407 = vunpack.c.l.b16 %v1359
      %v1408 = vunpack.c.l.b16 %v1360
      %v1409 = vunpack.c.l.b16 %v1361
      %v1410 = vunpack.c.l.b16 %v1362
      %v1411 = vunpack.c.l.b16 %v1363
      %v1412 = vunpack.c.l.b16 %v1364
      %v1413 = vunpack.c.l.b16 %v1365
      %v1414 = vunpack.c.l.b16 %v1366
      %v1415 = vunpack.c.l.b16 %v1367
      %v1416 = vunpack.c.l.b16 %v1368
      %v1417 = vunpack.c.l.b16 %v1369
      %v1418 = vunpack.c.l.b16 %v1370
      %v1419 = vunpack.c.l.b16 %v1371
      %v1420 = vpack.c.b16 %v1405, %v1404
      %v1421 = vpack.c.b16 %v1407, %v1406
      %v1422 = vpack.c.b16 %v1409, %v1408
      %v1423 = vpack.c.b16 %v1411, %v1410
      %v1424 = vpack.c.b16 %v1413, %v1412
      %v1425 = vpack.c.b16 %v1415, %v1414
      %v1426 = vpack.c.b16 %v1417, %v1416
      %v1427 = vpack.c.b16 %v1419, %v1418
      %1436 = vmatprep.subr.bf16.mxu0 0
      %1437 = vmatpush1.bf16.msra.mxu0 %v1427
      %1438 = vmatprep.subr.bf16.mxu0 0
      %1439 = vmatpush1.bf16.msra.mxu0 %v1426
      %1440 = vmatprep.subr.bf16.mxu0 0
      %1441 = vmatpush1.bf16.msra.mxu0 %v1425
      %1442 = vmatprep.subr.bf16.mxu0 0
      %1443 = vmatpush1.bf16.msra.mxu0 %v1424
      %1444 = vmatprep.subr.bf16.mxu0 0
      %1445 = vmatpush1.bf16.msra.mxu0 %v1423
      %1446 = vmatprep.subr.bf16.mxu0 0
      %1447 = vmatpush1.bf16.msra.mxu0 %v1422
      %1448 = vmatprep.subr.bf16.mxu0 0
      %1449 = vmatpush1.bf16.msra.mxu0 %v1421
      %1450 = vmatprep.subr.bf16.mxu0 0
      %1451 = vmatpush1.bf16.msra.mxu0 %v1420
      %1452 = vmatprep.subr.bf16.mxu0 0
      %1453 = vmatpush2.bf16.msra.mxu0 0
      %1454 = vmatprep.subr.bf16.mxu0 0
      %1455 = vmatpush2.bf16.msra.mxu0 0
      %1456 = vmatprep.subr.bf16.mxu0 0
      %1457 = vmatpush2.bf16.msra.mxu0 0
      %1458 = vmatprep.subr.bf16.mxu0 0
      %1459 = vmatpush2.bf16.msra.mxu0 0
      %1460 = vmatprep.subr.bf16.mxu0 0
      %1461 = vmatpush2.bf16.msra.mxu0 0
      %1462 = vmatprep.subr.bf16.mxu0 0
      %1463 = vmatpush2.bf16.msra.mxu0 0
      %1464 = vmatprep.subr.bf16.mxu0 0
      %1465 = vmatpush2.bf16.msra.mxu0 0
      %1466 = vmatprep.subr.bf16.mxu0 0
      %1467 = vmatpush2.bf16.msra.mxu0 0
      %1468 = vmatprep.mubr.bf16.mxu0 0
      %1469 = vmatmul.mubr.bf16.gmra.mxu0 %v1380
      %v1470 = vpop.f32.mrf.mxu0
      %v1471 = vadd.f32 0.0, %v1470
      %v1472 = vpop.f32.mrf.mxu0
      %v1473 = vpop.f32.mrf.mxu0
      %v1474 = vadd.f32 0.0, %v1473
      %v1475 = vpop.f32.mrf.mxu0
      %1476 = vmatprep.mubr.bf16.mxu0 0
      %1477 = vmatmul.mubr.bf16.gmra.mxu0 %v1381
      %v1478 = vpop.f32.mrf.mxu0
      %v1479 = vadd.f32 0.0, %v1478
      %v1480 = vpop.f32.mrf.mxu0
      %v1481 = vpop.f32.mrf.mxu0
      %v1482 = vadd.f32 0.0, %v1481
      %v1483 = vpop.f32.mrf.mxu0
      %1484 = vmatprep.mubr.bf16.mxu0 0
      %1485 = vmatmul.mubr.bf16.gmra.mxu0 %v1382
      %v1486 = vpop.f32.mrf.mxu0
      %v1487 = vadd.f32 0.0, %v1486
      %v1488 = vpop.f32.mrf.mxu0
      %v1489 = vpop.f32.mrf.mxu0
      %v1490 = vadd.f32 0.0, %v1489
      %v1491 = vpop.f32.mrf.mxu0
      %1492 = vmatprep.mubr.bf16.mxu0 0
      %1493 = vmatmul.mubr.bf16.gmra.mxu0 %v1383
      %v1494 = vpop.f32.mrf.mxu0
      %v1495 = vadd.f32 0.0, %v1494
      %v1496 = vpop.f32.mrf.mxu0
      %v1497 = vpop.f32.mrf.mxu0
      %v1498 = vadd.f32 0.0, %v1497
      %v1499 = vpop.f32.mrf.mxu0
      %1500 = vdwg.mxu0
      %v1501 = vadd.f32 %v1282, %v1471
      %v1502 = vadd.f32 %v1285, %v1474
      %v1503 = vadd.f32 %v1290, %v1479
      %v1504 = vadd.f32 %v1293, %v1482
      %v1505 = vadd.f32 %v1298, %v1487
      %v1506 = vadd.f32 %v1301, %v1490
      %v1507 = vadd.f32 %v1306, %v1495
      %v1508 = vadd.f32 %v1309, %v1498
      %v1509 = vld [vmem:[%s4] sm:$0x1]
      %v1511 = vlaneseq
      %v1512 = vshrl.u32 %v1511, 7
      %v1513 = vsub.s32 0, %v1512
      %v1514 = vrot.slane %v1509, %v1513
      %v1516 = vadd.f32 %v1501, %v1514
      %v1517 = vadd.f32 %v1502, %v1514
      %v1518 = vadd.f32 %v1503, %v1514
      %v1519 = vadd.f32 %v1504, %v1514
      %v1520 = vadd.f32 %v1505, %v1514
      %v1521 = vadd.f32 %v1506, %v1514
      %v1522 = vadd.f32 %v1507, %v1514
      %v1523 = vadd.f32 %v1508, %v1514
      %v1524 = vmax.f32 %v1516, 0.0
      %v1525 = vmax.f32 %v1517, 0.0
      %v1526 = vmax.f32 %v1518, 0.0
      %v1527 = vmax.f32 %v1519, 0.0
      %v1528 = vmax.f32 %v1520, 0.0
      %v1529 = vmax.f32 %v1521, 0.0
      %v1530 = vmax.f32 %v1522, 0.0
      %v1531 = vmax.f32 %v1523, 0.0
      %v1532 = vpack.c.bf16 %v1525, %v1524
      %v1533 = vpack.c.bf16 %v1527, %v1526
      %v1534 = vpack.c.bf16 %v1529, %v1528
      %v1535 = vpack.c.bf16 %v1531, %v1530
      %v1536 = vld [vmem:[%s5] sm:$0xff]
      %v1537 = vld [vmem:[%s5 + $0x8] sm:$0xff]
      %v1538 = vld [vmem:[%s5 + $0x10] sm:$0xff]
      %v1539 = vld [vmem:[%s5 + $0x18] sm:$0xff]
      %v1540 = vld [vmem:[%s5 + $0x20] sm:$0xff]
      %v1541 = vld [vmem:[%s5 + $0x28] sm:$0xff]
      %v1542 = vld [vmem:[%s5 + $0x30] sm:$0xff]
      %v1543 = vld [vmem:[%s5 + $0x38] sm:$0xff]
      %v1544 = vld [vmem:[%s5 + $0x40] sm:$0xff]
      %v1545 = vld [vmem:[%s5 + $0x48] sm:$0xff]
      %v1546 = vld [vmem:[%s5 + $0x50] sm:$0xff]
      %v1547 = vld [vmem:[%s5 + $0x58] sm:$0xff]
      %v1548 = vld [vmem:[%s5 + $0x60] sm:$0xff]
      %v1549 = vld [vmem:[%s5 + $0x68] sm:$0xff]
      %v1550 = vld [vmem:[%s5 + $0x70] sm:$0xff]
      %v1551 = vld [vmem:[%s5 + $0x78] sm:$0xff]
      %v1552 = vld [vmem:[%s5 + $0x80] sm:$0xff]
      %v1553 = vld [vmem:[%s5 + $0x88] sm:$0xff]
      %v1554 = vld [vmem:[%s5 + $0x90] sm:$0xff]
      %v1555 = vld [vmem:[%s5 + $0x98] sm:$0xff]
      %v1556 = vld [vmem:[%s5 + $0xa0] sm:$0xff]
      %v1557 = vld [vmem:[%s5 + $0xa8] sm:$0xff]
      %v1558 = vld [vmem:[%s5 + $0xb0] sm:$0xff]
      %v1559 = vld [vmem:[%s5 + $0xb8] sm:$0xff]
      %v1560 = vld [vmem:[%s5 + $0xc0] sm:$0xff]
      %v1561 = vld [vmem:[%s5 + $0xc8] sm:$0xff]
      %v1562 = vld [vmem:[%s5 + $0xd0] sm:$0xff]
      %v1563 = vld [vmem:[%s5 + $0xd8] sm:$0xff]
      %v1564 = vld [vmem:[%s5 + $0xe0] sm:$0xff]
      %v1565 = vld [vmem:[%s5 + $0xe8] sm:$0xff]
      %v1566 = vld [vmem:[%s5 + $0xf0] sm:$0xff]
      %v1567 = vld [vmem:[%s5 + $0xf8] sm:$0xff]
      %v1568 = vld [vmem:[%s278] sm:$0xff]
      %v1569 = vld [vmem:[%s278 + $0x8] sm:$0xff]
      %v1570 = vld [vmem:[%s278 + $0x10] sm:$0xff]
      %v1571 = vld [vmem:[%s278 + $0x18] sm:$0xff]
      %v1572 = vld [vmem:[%s278 + $0x20] sm:$0xff]
      %v1573 = vld [vmem:[%s278 + $0x28] sm:$0xff]
      %v1574 = vld [vmem:[%s278 + $0x30] sm:$0xff]
      %v1575 = vld [vmem:[%s278 + $0x38] sm:$0xff]
      %v1576 = vld [vmem:[%s278 + $0x40] sm:$0xff]
      %v1577 = vld [vmem:[%s278 + $0x48] sm:$0xff]
      %v1578 = vld [vmem:[%s278 + $0x50] sm:$0xff]
      %v1579 = vld [vmem:[%s278 + $0x58] sm:$0xff]
      %v1580 = vld [vmem:[%s278 + $0x60] sm:$0xff]
      %v1581 = vld [vmem:[%s278 + $0x68] sm:$0xff]
      %v1582 = vld [vmem:[%s278 + $0x70] sm:$0xff]
      %v1583 = vld [vmem:[%s278 + $0x78] sm:$0xff]
      %v1584 = vld [vmem:[%s278 + $0x80] sm:$0xff]
      %v1585 = vld [vmem:[%s278 + $0x88] sm:$0xff]
      %v1586 = vld [vmem:[%s278 + $0x90] sm:$0xff]
      %v1587 = vld [vmem:[%s278 + $0x98] sm:$0xff]
      %v1588 = vld [vmem:[%s278 + $0xa0] sm:$0xff]
      %v1589 = vld [vmem:[%s278 + $0xa8] sm:$0xff]
      %v1590 = vld [vmem:[%s278 + $0xb0] sm:$0xff]
      %v1591 = vld [vmem:[%s278 + $0xb8] sm:$0xff]
      %v1592 = vld [vmem:[%s278 + $0xc0] sm:$0xff]
      %v1593 = vld [vmem:[%s278 + $0xc8] sm:$0xff]
      %v1594 = vld [vmem:[%s278 + $0xd0] sm:$0xff]
      %v1595 = vld [vmem:[%s278 + $0xd8] sm:$0xff]
      %v1596 = vld [vmem:[%s278 + $0xe0] sm:$0xff]
      %v1597 = vld [vmem:[%s278 + $0xe8] sm:$0xff]
      %v1598 = vld [vmem:[%s278 + $0xf0] sm:$0xff]
      %v1599 = vld [vmem:[%s278 + $0xf8] sm:$0xff]
      %v1600 = vld [vmem:[%s6] sm:$0xf]
      %v1602 = vlaneseq
      %v1603 = vshrl.u32 %v1602, 7
      %v1604 = vsub.s32 0, %v1603
      %v1605 = vrot.slane %v1600, %v1604
      %v1606 = vlaneseq
      %v1607 = vshrl.u32 %v1606, 7
      %v1608 = vsub.s32 1, %v1607
      %v1609 = vrot.slane %v1600, %v1608
      %v1610 = vlaneseq
      %v1611 = vshrl.u32 %v1610, 7
      %v1612 = vsub.s32 2, %v1611
      %v1613 = vrot.slane %v1600, %v1612
      %v1614 = vlaneseq
      %v1615 = vshrl.u32 %v1614, 7
      %v1616 = vsub.s32 3, %v1615
      %v1617 = vrot.slane %v1600, %v1616
      %v1654 = vunpack.c.l.b16 %v1536
      %v1655 = vunpack.c.h.b16 %v1536
      %v1656 = vunpack.c.l.b16 %v1537
      %v1657 = vunpack.c.h.b16 %v1537
      %v1658 = vunpack.c.l.b16 %v1538
      %v1659 = vunpack.c.h.b16 %v1538
      %v1660 = vunpack.c.l.b16 %v1539
      %v1661 = vunpack.c.h.b16 %v1539
      %v1662 = vunpack.c.l.b16 %v1540
      %v1663 = vunpack.c.h.b16 %v1540
      %v1664 = vunpack.c.l.b16 %v1541
      %v1665 = vunpack.c.h.b16 %v1541
      %v1666 = vunpack.c.l.b16 %v1542
      %v1667 = vunpack.c.h.b16 %v1542
      %v1668 = vunpack.c.l.b16 %v1543
      %v1669 = vunpack.c.h.b16 %v1543
      %v1670 = vunpack.c.l.b16 %v1544
      %v1671 = vunpack.c.h.b16 %v1544
      %v1672 = vunpack.c.l.b16 %v1545
      %v1673 = vunpack.c.h.b16 %v1545
      %v1674 = vunpack.c.l.b16 %v1546
      %v1675 = vunpack.c.h.b16 %v1546
      %v1676 = vunpack.c.l.b16 %v1547
      %v1677 = vunpack.c.h.b16 %v1547
      %v1678 = vunpack.c.l.b16 %v1548
      %v1679 = vunpack.c.h.b16 %v1548
      %v1680 = vunpack.c.l.b16 %v1549
      %v1681 = vunpack.c.h.b16 %v1549
      %v1682 = vunpack.c.l.b16 %v1550
      %v1683 = vunpack.c.h.b16 %v1550
      %v1684 = vunpack.c.l.b16 %v1551
      %v1685 = vunpack.c.h.b16 %v1551
      %v1686 = vunpack.c.l.b16 %v1552
      %v1687 = vunpack.c.h.b16 %v1552
      %v1688 = vunpack.c.l.b16 %v1553
      %v1689 = vunpack.c.h.b16 %v1553
      %v1690 = vunpack.c.l.b16 %v1554
      %v1691 = vunpack.c.h.b16 %v1554
      %v1692 = vunpack.c.l.b16 %v1555
      %v1693 = vunpack.c.h.b16 %v1555
      %v1694 = vunpack.c.l.b16 %v1556
      %v1695 = vunpack.c.h.b16 %v1556
      %v1696 = vunpack.c.l.b16 %v1557
      %v1697 = vunpack.c.h.b16 %v1557
      %v1698 = vunpack.c.l.b16 %v1558
      %v1699 = vunpack.c.h.b16 %v1558
      %v1700 = vunpack.c.l.b16 %v1559
      %v1701 = vunpack.c.h.b16 %v1559
      %v1702 = vunpack.c.l.b16 %v1560
      %v1703 = vunpack.c.h.b16 %v1560
      %v1704 = vunpack.c.l.b16 %v1561
      %v1705 = vunpack.c.h.b16 %v1561
      %v1706 = vunpack.c.l.b16 %v1562
      %v1707 = vunpack.c.h.b16 %v1562
      %v1708 = vunpack.c.l.b16 %v1563
      %v1709 = vunpack.c.h.b16 %v1563
      %v1710 = vunpack.c.l.b16 %v1564
      %v1711 = vunpack.c.h.b16 %v1564
      %v1712 = vunpack.c.l.b16 %v1565
      %v1713 = vunpack.c.h.b16 %v1565
      %v1714 = vunpack.c.l.b16 %v1566
      %v1715 = vunpack.c.h.b16 %v1566
      %v1716 = vunpack.c.l.b16 %v1567
      %v1717 = vunpack.c.h.b16 %v1567
      %v1718 = vpack.c.b16 %v1658, %v1654
      %v1719 = vpack.c.b16 %v1659, %v1655
      %v1720 = vpack.c.b16 %v1660, %v1656
      %v1721 = vpack.c.b16 %v1661, %v1657
      %v1722 = vpack.c.b16 %v1666, %v1662
      %v1723 = vpack.c.b16 %v1667, %v1663
      %v1724 = vpack.c.b16 %v1668, %v1664
      %v1725 = vpack.c.b16 %v1669, %v1665
      %v1726 = vpack.c.b16 %v1674, %v1670
      %v1727 = vpack.c.b16 %v1675, %v1671
      %v1728 = vpack.c.b16 %v1676, %v1672
      %v1729 = vpack.c.b16 %v1677, %v1673
      %v1730 = vpack.c.b16 %v1682, %v1678
      %v1731 = vpack.c.b16 %v1683, %v1679
      %v1732 = vpack.c.b16 %v1684, %v1680
      %v1733 = vpack.c.b16 %v1685, %v1681
      %v1734 = vpack.c.b16 %v1690, %v1686
      %v1735 = vpack.c.b16 %v1691, %v1687
      %v1736 = vpack.c.b16 %v1692, %v1688
      %v1737 = vpack.c.b16 %v1693, %v1689
      %v1738 = vpack.c.b16 %v1698, %v1694
      %v1739 = vpack.c.b16 %v1699, %v1695
      %v1740 = vpack.c.b16 %v1700, %v1696
      %v1741 = vpack.c.b16 %v1701, %v1697
      %v1742 = vpack.c.b16 %v1706, %v1702
      %v1743 = vpack.c.b16 %v1707, %v1703
      %v1744 = vpack.c.b16 %v1708, %v1704
      %v1745 = vpack.c.b16 %v1709, %v1705
      %v1746 = vpack.c.b16 %v1714, %v1710
      %v1747 = vpack.c.b16 %v1715, %v1711
      %v1748 = vpack.c.b16 %v1716, %v1712
      %v1749 = vpack.c.b16 %v1717, %v1713
      %1782 = vmatprep.subr.bf16.mxu0 %v1747
      %1783 = vmatpush1.bf16.msra.mxu0 %v1746
      %1784 = vmatprep.subr.bf16.mxu0 %v1743
      %1785 = vmatpush1.bf16.msra.mxu0 %v1742
      %1786 = vmatprep.subr.bf16.mxu0 %v1739
      %1787 = vmatpush1.bf16.msra.mxu0 %v1738
      %1788 = vmatprep.subr.bf16.mxu0 %v1735
      %1789 = vmatpush1.bf16.msra.mxu0 %v1734
      %1790 = vmatprep.subr.bf16.mxu0 %v1731
      %1791 = vmatpush1.bf16.msra.mxu0 %v1730
      %1792 = vmatprep.subr.bf16.mxu0 %v1727
      %1793 = vmatpush1.bf16.msra.mxu0 %v1726
      %1794 = vmatprep.subr.bf16.mxu0 %v1723
      %1795 = vmatpush1.bf16.msra.mxu0 %v1722
      %1796 = vmatprep.subr.bf16.mxu0 %v1719
      %1797 = vmatpush1.bf16.msra.mxu0 %v1718
      %1798 = vmatprep.subr.bf16.mxu0 0
      %1799 = vmatpush2.bf16.msra.mxu0 0
      %1800 = vmatprep.subr.bf16.mxu0 0
      %1801 = vmatpush2.bf16.msra.mxu0 0
      %1802 = vmatprep.subr.bf16.mxu0 0
      %1803 = vmatpush2.bf16.msra.mxu0 0
      %1804 = vmatprep.subr.bf16.mxu0 0
      %1805 = vmatpush2.bf16.msra.mxu0 0
      %1806 = vmatprep.subr.bf16.mxu0 0
      %1807 = vmatpush2.bf16.msra.mxu0 0
      %1808 = vmatprep.subr.bf16.mxu0 0
      %1809 = vmatpush2.bf16.msra.mxu0 0
      %1810 = vmatprep.subr.bf16.mxu0 0
      %1811 = vmatpush2.bf16.msra.mxu0 0
      %1812 = vmatprep.subr.bf16.mxu0 0
      %1813 = vmatpush2.bf16.msra.mxu0 0
      %1814 = vmatprep.mubr.bf16.mxu0 0
      %1815 = vmatmul.mubr.bf16.gmra.mxu0 %v1532
      %v1816 = vpop.f32.mrf.mxu0
      %v1817 = vadd.f32 %v1605, %v1816
      %v1818 = vpop.f32.mrf.mxu0
      %v1819 = vadd.f32 %v1609, %v1818
      %v1820 = vpop.f32.mrf.mxu0
      %v1821 = vadd.f32 %v1605, %v1820
      %v1822 = vpop.f32.mrf.mxu0
      %v1823 = vadd.f32 %v1609, %v1822
      %1824 = vmatprep.mubr.bf16.mxu0 0
      %1825 = vmatmul.mubr.bf16.gmra.mxu0 %v1533
      %v1826 = vpop.f32.mrf.mxu0
      %v1827 = vadd.f32 %v1605, %v1826
      %v1828 = vpop.f32.mrf.mxu0
      %v1829 = vadd.f32 %v1609, %v1828
      %v1830 = vpop.f32.mrf.mxu0
      %v1831 = vadd.f32 %v1605, %v1830
      %v1832 = vpop.f32.mrf.mxu0
      %v1833 = vadd.f32 %v1609, %v1832
      %1834 = vmatprep.mubr.bf16.mxu0 0
      %1835 = vmatmul.mubr.bf16.gmra.mxu0 %v1534
      %v1836 = vpop.f32.mrf.mxu0
      %v1837 = vadd.f32 %v1605, %v1836
      %v1838 = vpop.f32.mrf.mxu0
      %v1839 = vadd.f32 %v1609, %v1838
      %v1840 = vpop.f32.mrf.mxu0
      %v1841 = vadd.f32 %v1605, %v1840
      %v1842 = vpop.f32.mrf.mxu0
      %v1843 = vadd.f32 %v1609, %v1842
      %1844 = vmatprep.mubr.bf16.mxu0 0
      %1845 = vmatmul.mubr.bf16.gmra.mxu0 %v1535
      %v1846 = vpop.f32.mrf.mxu0
      %v1847 = vadd.f32 %v1605, %v1846
      %v1848 = vpop.f32.mrf.mxu0
      %v1849 = vadd.f32 %v1609, %v1848
      %v1850 = vpop.f32.mrf.mxu0
      %v1851 = vadd.f32 %v1605, %v1850
      %v1852 = vpop.f32.mrf.mxu0
      %v1853 = vadd.f32 %v1609, %v1852
      %1854 = vdwg.mxu0
      %1855 = vmatprep.subr.bf16.mxu0 %v1749
      %1856 = vmatpush1.bf16.msra.mxu0 %v1748
      %1857 = vmatprep.subr.bf16.mxu0 %v1745
      %1858 = vmatpush1.bf16.msra.mxu0 %v1744
      %1859 = vmatprep.subr.bf16.mxu0 %v1741
      %1860 = vmatpush1.bf16.msra.mxu0 %v1740
      %1861 = vmatprep.subr.bf16.mxu0 %v1737
      %1862 = vmatpush1.bf16.msra.mxu0 %v1736
      %1863 = vmatprep.subr.bf16.mxu0 %v1733
      %1864 = vmatpush1.bf16.msra.mxu0 %v1732
      %1865 = vmatprep.subr.bf16.mxu0 %v1729
      %1866 = vmatpush1.bf16.msra.mxu0 %v1728
      %1867 = vmatprep.subr.bf16.mxu0 %v1725
      %1868 = vmatpush1.bf16.msra.mxu0 %v1724
      %1869 = vmatprep.subr.bf16.mxu0 %v1721
      %1870 = vmatpush1.bf16.msra.mxu0 %v1720
      %1871 = vmatprep.subr.bf16.mxu0 0
      %1872 = vmatpush2.bf16.msra.mxu0 0
      %1873 = vmatprep.subr.bf16.mxu0 0
      %1874 = vmatpush2.bf16.msra.mxu0 0
      %1875 = vmatprep.subr.bf16.mxu0 0
      %1876 = vmatpush2.bf16.msra.mxu0 0
      %1877 = vmatprep.subr.bf16.mxu0 0
      %1878 = vmatpush2.bf16.msra.mxu0 0
      %1879 = vmatprep.subr.bf16.mxu0 0
      %1880 = vmatpush2.bf16.msra.mxu0 0
      %1881 = vmatprep.subr.bf16.mxu0 0
      %1882 = vmatpush2.bf16.msra.mxu0 0
      %1883 = vmatprep.subr.bf16.mxu0 0
      %1884 = vmatpush2.bf16.msra.mxu0 0
      %1885 = vmatprep.subr.bf16.mxu0 0
      %1886 = vmatpush2.bf16.msra.mxu0 0
      %1887 = vmatprep.mubr.bf16.mxu0 0
      %1888 = vmatmul.mubr.bf16.gmra.mxu0 %v1532
      %v1889 = vpop.f32.mrf.mxu0
      %v1890 = vadd.f32 %v1613, %v1889
      %v1891 = vpop.f32.mrf.mxu0
      %v1892 = vadd.f32 %v1617, %v1891
      %v1893 = vpop.f32.mrf.mxu0
      %v1894 = vadd.f32 %v1613, %v1893
      %v1895 = vpop.f32.mrf.mxu0
      %v1896 = vadd.f32 %v1617, %v1895
      %1897 = vmatprep.mubr.bf16.mxu0 0
      %1898 = vmatmul.mubr.bf16.gmra.mxu0 %v1533
      %v1899 = vpop.f32.mrf.mxu0
      %v1900 = vadd.f32 %v1613, %v1899
      %v1901 = vpop.f32.mrf.mxu0
      %v1902 = vadd.f32 %v1617, %v1901
      %v1903 = vpop.f32.mrf.mxu0
      %v1904 = vadd.f32 %v1613, %v1903
      %v1905 = vpop.f32.mrf.mxu0
      %v1906 = vadd.f32 %v1617, %v1905
      %1907 = vmatprep.mubr.bf16.mxu0 0
      %1908 = vmatmul.mubr.bf16.gmra.mxu0 %v1534
      %v1909 = vpop.f32.mrf.mxu0
      %v1910 = vadd.f32 %v1613, %v1909
      %v1911 = vpop.f32.mrf.mxu0
      %v1912 = vadd.f32 %v1617, %v1911
      %v1913 = vpop.f32.mrf.mxu0
      %v1914 = vadd.f32 %v1613, %v1913
      %v1915 = vpop.f32.mrf.mxu0
      %v1916 = vadd.f32 %v1617, %v1915
      %1917 = vmatprep.mubr.bf16.mxu0 0
      %1918 = vmatmul.mubr.bf16.gmra.mxu0 %v1535
      %v1919 = vpop.f32.mrf.mxu0
      %v1920 = vadd.f32 %v1613, %v1919
      %v1921 = vpop.f32.mrf.mxu0
      %v1922 = vadd.f32 %v1617, %v1921
      %v1923 = vpop.f32.mrf.mxu0
      %v1924 = vadd.f32 %v1613, %v1923
      %v1925 = vpop.f32.mrf.mxu0
      %v1926 = vadd.f32 %v1617, %v1925
      %1927 = vdwg.mxu0
      %v1928 = vadd.f32 %v1817, %v1568
      %v1929 = vadd.f32 %v1819, %v1569
      %v1930 = vadd.f32 %v1890, %v1570
      %v1931 = vadd.f32 %v1892, %v1571
      %v1932 = vadd.f32 %v1821, %v1572
      %v1933 = vadd.f32 %v1823, %v1573
      %v1934 = vadd.f32 %v1894, %v1574
      %v1935 = vadd.f32 %v1896, %v1575
      %v1936 = vadd.f32 %v1827, %v1576
      %v1937 = vadd.f32 %v1829, %v1577
      %v1938 = vadd.f32 %v1900, %v1578
      %v1939 = vadd.f32 %v1902, %v1579
      %v1940 = vadd.f32 %v1831, %v1580
      %v1941 = vadd.f32 %v1833, %v1581
      %v1942 = vadd.f32 %v1904, %v1582
      %v1943 = vadd.f32 %v1906, %v1583
      %v1944 = vadd.f32 %v1837, %v1584
      %v1945 = vadd.f32 %v1839, %v1585
      %v1946 = vadd.f32 %v1910, %v1586
      %v1947 = vadd.f32 %v1912, %v1587
      %v1948 = vadd.f32 %v1841, %v1588
      %v1949 = vadd.f32 %v1843, %v1589
      %v1950 = vadd.f32 %v1914, %v1590
      %v1951 = vadd.f32 %v1916, %v1591
      %v1952 = vadd.f32 %v1847, %v1592
      %v1953 = vadd.f32 %v1849, %v1593
      %v1954 = vadd.f32 %v1920, %v1594
      %v1955 = vadd.f32 %v1922, %v1595
      %v1956 = vadd.f32 %v1851, %v1596
      %v1957 = vadd.f32 %v1853, %v1597
      %v1958 = vadd.f32 %v1924, %v1598
      %v1959 = vadd.f32 %v1926, %v1599
      %v1960 = vmax.f32 %v1928, 0.0
      %v1961 = vmax.f32 %v1929, 0.0
      %v1962 = vmax.f32 %v1930, 0.0
      %v1963 = vmax.f32 %v1931, 0.0
      %v1964 = vmax.f32 %v1932, 0.0
      %v1965 = vmax.f32 %v1933, 0.0
      %v1966 = vmax.f32 %v1934, 0.0
      %v1967 = vmax.f32 %v1935, 0.0
      %v1968 = vmax.f32 %v1936, 0.0
      %v1969 = vmax.f32 %v1937, 0.0
      %v1970 = vmax.f32 %v1938, 0.0
      %v1971 = vmax.f32 %v1939, 0.0
      %v1972 = vmax.f32 %v1940, 0.0
      %v1973 = vmax.f32 %v1941, 0.0
      %v1974 = vmax.f32 %v1942, 0.0
      %v1975 = vmax.f32 %v1943, 0.0
      %v1976 = vmax.f32 %v1944, 0.0
      %v1977 = vmax.f32 %v1945, 0.0
      %v1978 = vmax.f32 %v1946, 0.0
      %v1979 = vmax.f32 %v1947, 0.0
      %v1980 = vmax.f32 %v1948, 0.0
      %v1981 = vmax.f32 %v1949, 0.0
      %v1982 = vmax.f32 %v1950, 0.0
      %v1983 = vmax.f32 %v1951, 0.0
      %v1984 = vmax.f32 %v1952, 0.0
      %v1985 = vmax.f32 %v1953, 0.0
      %v1986 = vmax.f32 %v1954, 0.0
      %v1987 = vmax.f32 %v1955, 0.0
      %v1988 = vmax.f32 %v1956, 0.0
      %v1989 = vmax.f32 %v1957, 0.0
      %v1990 = vmax.f32 %v1958, 0.0
      %v1991 = vmax.f32 %v1959, 0.0
      %1992 = vst [vmem:[%s285] sm:$0xff] %v1960
      %1993 = vst [vmem:[%s285 + $0x8] sm:$0xff] %v1961
      %1994 = vst [vmem:[%s285 + $0x10] sm:$0xff] %v1962
      %1995 = vst [vmem:[%s285 + $0x18] sm:$0xff] %v1963
      %1996 = vst [vmem:[%s285 + $0x20] sm:$0xff] %v1964
      %1997 = vst [vmem:[%s285 + $0x28] sm:$0xff] %v1965
      %1998 = vst [vmem:[%s285 + $0x30] sm:$0xff] %v1966
      %1999 = vst [vmem:[%s285 + $0x38] sm:$0xff] %v1967
      %2000 = vst [vmem:[%s285 + $0x40] sm:$0xff] %v1968
      %2001 = vst [vmem:[%s285 + $0x48] sm:$0xff] %v1969
      %2002 = vst [vmem:[%s285 + $0x50] sm:$0xff] %v1970
      %2003 = vst [vmem:[%s285 + $0x58] sm:$0xff] %v1971
      %2004 = vst [vmem:[%s285 + $0x60] sm:$0xff] %v1972
      %2005 = vst [vmem:[%s285 + $0x68] sm:$0xff] %v1973
      %2006 = vst [vmem:[%s285 + $0x70] sm:$0xff] %v1974
      %2007 = vst [vmem:[%s285 + $0x78] sm:$0xff] %v1975
      %2008 = vst [vmem:[%s285 + $0x80] sm:$0xff] %v1976
      %2009 = vst [vmem:[%s285 + $0x88] sm:$0xff] %v1977
      %2010 = vst [vmem:[%s285 + $0x90] sm:$0xff] %v1978
      %2011 = vst [vmem:[%s285 + $0x98] sm:$0xff] %v1979
      %2012 = vst [vmem:[%s285 + $0xa0] sm:$0xff] %v1980
      %2013 = vst [vmem:[%s285 + $0xa8] sm:$0xff] %v1981
      %2014 = vst [vmem:[%s285 + $0xb0] sm:$0xff] %v1982
      %2015 = vst [vmem:[%s285 + $0xb8] sm:$0xff] %v1983
      %2016 = vst [vmem:[%s285 + $0xc0] sm:$0xff] %v1984
      %2017 = vst [vmem:[%s285 + $0xc8] sm:$0xff] %v1985
      %2018 = vst [vmem:[%s285 + $0xd0] sm:$0xff] %v1986
      %2019 = vst [vmem:[%s285 + $0xd8] sm:$0xff] %v1987
      %2020 = vst [vmem:[%s285 + $0xe0] sm:$0xff] %v1988
      %2021 = vst [vmem:[%s285 + $0xe8] sm:$0xff] %v1989
      %2022 = vst [vmem:[%s285 + $0xf0] sm:$0xff] %v1990
      %2023 = vst [vmem:[%s285 + $0xf8] sm:$0xff] %v1991
      %s2024 = smul.u32 4, %s18
      %p2025 = scmp.lt.s32.totalorder %s2024, 7
      %s2026 = scalar_select %p2025, %s2024, 7
      %s2027 = smul.addr %s2026, 8
      %s2028 = smul.addr %s2027, 8
      %s2029 = scalar_lea.vmem %s7, %s2028
      // Predicated region
      $region49: #{_lambda_.1} parent=47 // pred_check
        %p2030 = pneg %p188
      $region50: #{_lambda_.1} parent=47 // pred_check_branch
        %2032 = sbr.rel (%p2030) target = $region52
      $region51: #{_lambda_.1} parent=47 // pred_region
        %s2033 = smul.u32 4, %s18
      $region52: #{_lambda_.1} parent=47 // pred_fallthru
        _
    $region48: #{_lambda_.1} parent=5 // pred_fallthru
      _
    %p2034 = scmp.le.s32.totalorder 2, %s13
    // Predicated region
    $region53: #{_lambda_.1} parent=5 // pred_check
      %p2035 = pneg %p2034
    $region54: #{_lambda_.1} parent=5 // pred_check_branch
      %2037 = sbr.rel (%p2035) target = $region56
    $region55: #{_lambda_.1} parent=5 // pred_region
      %s2038 = ssub.s32 %s13, 2
      // Predicated region
      $region57: #{_lambda_.1} parent=55 // pred_check
        %p2039 = pneg %p194
      $region58: #{_lambda_.1} parent=55 // pred_check_branch
        %2041 = sbr.rel (%p2039) target = $region60
      $region59: #{_lambda_.1} parent=55 // pred_region
        %s2042 = smul.u32 4, %s19
        %p2043 = scmp.lt.s32.totalorder %s2042, 7
        %s2044 = scalar_select %p2043, %s2042, 7
        %s2045 = smul.addr %s2044, 8
        %s2046 = smul.addr %s2045, 8
        %s2047 = scalar_lea.vmem %s7, %s2046
      $region60: #{_lambda_.1} parent=55 // pred_fallthru
        _
    $region56: #{_lambda_.1} parent=5 // pred_fallthru
      _
  $region6: #{_lambda_.1} parent=0 // loop_footer
    %s17 = sadd.s32 1, %s13
  $region7: #{_lambda_.1} parent=0 // loop_footer_branch
    %12 = sbr.rel target = $region3
  $region8: #{_lambda_.1} parent=0 // loop_exit
    _

</llo_original>
